<compile_context>
chip_gen: v7x
topology: tpu7x:2x2x1
jax: 0.10.0
libtpu: 0.0.40
codegen_flags: <defaults>
</compile_context>

<pallas_src>
import functools

import jax
import jax.numpy as jnp
from jax import lax
from jax.experimental import pallas as pl
from jax.experimental.pallas import tpu as pltpu


def _resblock_kernel(x_ref, wb_ref, o_ref, xg_ref, *,
                     k, p, W, HW, C, Nb, gl, L, negative_slope):
    # x_ref  : (Nb*C, HW)        channel-major, flat spatial on lanes (residual + conv src)
    # wb_ref : (C, k*k*C + 1)    single tile; col (dy*k+dx)*C + ci = w[:, ci, dy, dx];
    #                            last column = bias
    # o_ref  : (Nb*C, HW)        lane-dense output block
    # xg_ref : (Nb*C, L)         VMEM scratch: zero-guarded copy of x (128-lane guards)
    NC = Nb * C

    x = x_ref[...]                                            # (NC, HW), loaded once

    # Build the zero-guarded copy in VMEM (replaces the wrapper-side jnp.pad).
    # All three stores are lane-tile aligned (guards are full 128-lane strips).
    xg_ref[:, 0:gl] = jnp.zeros((NC, gl), jnp.float32)
    xg_ref[:, gl + HW:L] = jnp.zeros((NC, L - gl - HW), jnp.float32)
    xg_ref[:, gl:gl + HW] = x.astype(jnp.float32)

    wb = wb_ref[...]                                          # (C, k*k*C+1), one tile
    bias = wb[:, k * k * C:k * k * C + 1]                     # (C, 1)

    # Horizontal edge masks: built ONCE per dx offset, shared by all taps / images.
    col = lax.broadcasted_iota(jnp.int32, (1, HW), 1)
    col = jnp.bitwise_and(col, W - 1) if (W & (W - 1)) == 0 else col % W
    masks = {}
    for dx in range(k):
        o = dx - p
        if o < 0:
            masks[dx] = (col >= -o).astype(jnp.float32)       # zero left-edge wrap
        elif o > 0:
            masks[dx] = (col <= W - 1 - o).astype(jnp.float32)  # zero right-edge wrap
        else:
            masks[dx] = None                                  # center column: no mask

    # Per-image guarded views, loaded once from scratch.
    xg = [xg_ref[n * C:(n + 1) * C, :] for n in range(Nb)]    # Nb x (C, L)

    accs = [jnp.zeros((C, HW), jnp.float32) for _ in range(Nb)]
    for dx in range(k):
        taps = [jnp.zeros((C, HW), jnp.float32) for _ in range(Nb)]
        for dy in range(k):
            start = gl + (dy - p) * W + (dx - p)              # static tap window offset
            patches = [xg[n][:, start:start + HW] for n in range(Nb)]   # (C, HW) each
            for ci in range(C):
                idx = (dy * k + dx) * C + ci
                wcol = wb[:, idx:idx + 1]                     # (C_out, 1), traced once
                for n in range(Nb):
                    # Tiny-C channel mixing on the VPU: (C_out,1)*(1,HW) broadcast FMA.
                    taps[n] = taps[n] + wcol * patches[n][ci:ci + 1, :]
        m = masks[dx]
        for n in range(Nb):
            accs[n] = accs[n] + (taps[n] if m is None else m * taps[n])

    for n in range(Nb):
        a = accs[n] + bias                                    # (C,1) bias, lane broadcast
        y = jnp.where(a > 0, a, negative_slope * a)           # leaky_relu
        resid = x[n * C:(n + 1) * C, :].astype(jnp.float32)
        o_ref[n * C:(n + 1) * C, :] = (resid + y).astype(o_ref.dtype)


def resblock_forward(x_nchw, w_oihw, bias, *, padding=1, negative_slope=0.01,
                     images_per_step=None):
    """x_nchw: (N, C, H, W); w_oihw: (C, C, k, k); bias: (C,). Returns (N, C, H, W).

    images_per_step=None processes the whole batch in a single grid step (best on
    single-TC v5e/v6e). On v7x, images_per_step = N // 2 keeps a 2-wide "parallel"
    grid so the two TensorCores split the batch (requires images_per_step*C % 8 == 0
    for full-width blocks).
    """
    N, C, H, W = x_nchw.shape
    k = w_oihw.shape[-1]
    p = padding
    assert 0 <= p <= k - 1, "expects 'same'-style padding (0 <= padding <= k-1)"
    HW = H * W
    Nb = N if images_per_step is None else images_per_step
    assert N % Nb == 0

    # Guard strips are one full 128-lane tile on each side -> aligned in-kernel stores.
    GL = 128
    assert p * (W + 1) <= GL and (k - 1 - p) * (W + 1) <= GL, "guard tile too small"
    L = GL + HW + GL

    # Channel-major flatten: pure reshape, no transpose, no pad in the wrapper.
    x_flat = x_nchw.reshape(N * C, HW)

    # Weights + bias packed into one (C, k*k*C + 1) tile:
    # column (dy*k+dx)*C + ci  =  w_oihw[:, ci, dy, dx];  last column = bias.
    w_cols = jnp.transpose(w_oihw, (0, 2, 3, 1)).reshape(C, k * k * C).astype(jnp.float32)
    wb = jnp.concatenate([w_cols, bias.reshape(C, 1).astype(jnp.float32)], axis=1)

    kernel = functools.partial(_resblock_kernel, k=k, p=p, W=W, HW=HW, C=C,
                               Nb=Nb, gl=GL, L=L, negative_slope=negative_slope)

    flops = 2 * N * C * C * k * k * HW
    bytes_accessed = 2 * N * C * HW * int(jnp.dtype(x_flat.dtype).itemsize) + int(wb.size) * 4

    out = pl.pallas_call(
        kernel,
        out_shape=jax.ShapeDtypeStruct((N * C, HW), x_nchw.dtype),
        grid_spec=pltpu.PrefetchScalarGridSpec(
            num_scalar_prefetch=0,
            grid=(N // Nb,),
            in_specs=[
                pl.BlockSpec((Nb * C, HW), lambda i: (i, 0)),
                pl.BlockSpec((C, k * k * C + 1), lambda i: (0, 0)),
            ],
            out_specs=pl.BlockSpec((Nb * C, HW), lambda i: (i, 0)),
            scratch_shapes=[pltpu.VMEM((Nb * C, L), jnp.float32)],
        ),
        compiler_params=pltpu.CompilerParams(dimension_semantics=("parallel",)),
        cost_estimate=pl.CostEstimate(flops=flops, transcendentals=0,
                                      bytes_accessed=bytes_accessed),
    )(x_flat, wb)

    return out.reshape(N, C, H, W)                            # reshape only, no transpose


def _reference(x_nchw, w_oihw, bias, *, padding=1, negative_slope=0.01):
    conv = lax.conv_general_dilated(
        x_nchw, w_oihw, window_strides=(1, 1),
        padding=[(padding, padding), (padding, padding)],
        dimension_numbers=("NCHW", "OIHW", "NCHW"),
    ) + bias[None, :, None, None]
    act = jnp.where(conv > 0, conv, negative_slope * conv)
    return x_nchw + act


if __name__ == "__main__":
    # conv_params: kernel_size=3, padding=1 ; feat_type ~ 4 channels
    N, C, H, W, k = 2, 4, 16, 16, 3

    key = jax.random.PRNGKey(0)
    kx, kw, kb = jax.random.split(key, 3)
    x = jax.random.normal(kx, (N, C, H, W), dtype=jnp.float32)

    # Deterministic "basis-expanded" filter + bias (init_as_id=False path).
    w = 0.1 * jax.random.normal(kw, (C, C, k, k), dtype=jnp.float32)
    b = 0.1 * jax.random.normal(kb, (C,), dtype=jnp.float32)

    out = jax.block_until_ready(resblock_forward(x, w, b))
    ref = _reference(x, w, b)
    assert jnp.allclose(out, ref, atol=1e-5, rtol=1e-5), "mismatch vs reference"

    # init_as_id=True path (module default): zero weights/bias -> identity.
    w0 = jnp.zeros_like(w)
    b0 = jnp.zeros_like(b)
    out_id = jax.block_until_ready(resblock_forward(x, w0, b0))
    assert jnp.allclose(out_id, x, atol=1e-6), "init_as_id path should be identity"

    print("KERNEL_OK")
</pallas_src>

<mosaic_0001>
module attributes {stable_mosaic.version = 11 : i64} {
  func.func @_resblock_kernel(%arg0: i32, %arg1: memref<8x256xf32, #tpu.memory_space<vmem>>, %arg2: memref<4x37xf32, #tpu.memory_space<vmem>>, %arg3: memref<8x256xf32, #tpu.memory_space<vmem>>, %arg4: memref<8x512xf32, #tpu.memory_space<vmem>>) attributes {dimension_semantics = [#tpu.dimension_semantics<parallel>], iteration_bounds = array<i64: 1>, scalar_prefetch = 0 : i64, scratch_operands = 1 : i64, tpu.core_type = #tpu.core_type<tc>, window_params = [{transform_indices = @transform_0, window_bounds = array<i64: 8, 256>}, {pipeline_mode = #tpu.pipeline_mode<synchronous>, transform_indices = @transform_1, window_bounds = array<i64: 4, 37>}, {transform_indices = @transform_2, window_bounds = array<i64: 8, 256>}]} {
    %c0 = arith.constant 0 : index
    %c0_0 = arith.constant 0 : index
    %0 = vector.load %arg1[%c0, %c0_0] : memref<8x256xf32, #tpu.memory_space<vmem>>, vector<8x256xf32>
    %cst = arith.constant 0.000000e+00 : f32
    %1 = vector.broadcast %cst : f32 to vector<8x128xf32>
    %c0_1 = arith.constant 0 : index
    %c0_2 = arith.constant 0 : index
    %2 = vector.load %arg4[%c0_1, %c0_2] : memref<8x512xf32, #tpu.memory_space<vmem>>, vector<8x128xf32>
    tpu.vector_store %arg4[%c0_1, %c0_2], %1 {strides = array<i32>} : memref<8x512xf32, #tpu.memory_space<vmem>>, vector<8x128xf32>,
    %cst_3 = arith.constant 0.000000e+00 : f32
    %3 = vector.broadcast %cst_3 : f32 to vector<8x128xf32>
    %c0_4 = arith.constant 0 : index
    %c384 = arith.constant 384 : index
    %4 = vector.load %arg4[%c0_4, %c384] : memref<8x512xf32, #tpu.memory_space<vmem>>, vector<8x128xf32>
    tpu.vector_store %arg4[%c0_4, %c384], %3 {strides = array<i32>} : memref<8x512xf32, #tpu.memory_space<vmem>>, vector<8x128xf32>,
    %c0_5 = arith.constant 0 : index
    %c128 = arith.constant 128 : index
    %5 = vector.load %arg4[%c0_5, %c128] : memref<8x512xf32, #tpu.memory_space<vmem>>, vector<8x256xf32>
    tpu.vector_store %arg4[%c0_5, %c128], %0 {strides = array<i32>} : memref<8x512xf32, #tpu.memory_space<vmem>>, vector<8x256xf32>,
    %c0_6 = arith.constant 0 : index
    %c0_7 = arith.constant 0 : index
    %6 = vector.load %arg2[%c0_6, %c0_7] : memref<4x37xf32, #tpu.memory_space<vmem>>, vector<4x37xf32>
    %7 = vector.extract_strided_slice %6 {offsets = [0, 36], sizes = [4, 1], strides = [1, 1]} : vector<4x37xf32> to vector<4x1xf32>
    %8 = tpu.iota {dimensions = array<i32: 1>} : vector<1x256xi32>
    %c15_i32 = arith.constant 15 : i32
    %9 = vector.broadcast %c15_i32 : i32 to vector<1x256xi32>
    %10 = arith.andi %8, %9 : vector<1x256xi32>
    %c1_i32 = arith.constant 1 : i32
    %11 = vector.broadcast %c1_i32 : i32 to vector<1x256xi32>
    %12 = arith.cmpi sge, %10, %11 : vector<1x256xi32>
    %13 = arith.extui %12 : vector<1x256xi1> to vector<1x256xi32>
    %14 = arith.sitofp %13 : vector<1x256xi32> to vector<1x256xf32>
    %c14_i32 = arith.constant 14 : i32
    %15 = vector.broadcast %c14_i32 : i32 to vector<1x256xi32>
    %16 = arith.cmpi sle, %10, %15 : vector<1x256xi32>
    %17 = arith.extui %16 : vector<1x256xi1> to vector<1x256xi32>
    %18 = arith.sitofp %17 : vector<1x256xi32> to vector<1x256xf32>
    %c0_8 = arith.constant 0 : index
    %c0_9 = arith.constant 0 : index
    %19 = vector.load %arg4[%c0_8, %c0_9] : memref<8x512xf32, #tpu.memory_space<vmem>>, vector<4x512xf32>
    %c4 = arith.constant 4 : index
    %c0_10 = arith.constant 0 : index
    %20 = vector.load %arg4[%c4, %c0_10] : memref<8x512xf32, #tpu.memory_space<vmem>>, vector<4x512xf32>
    %cst_11 = arith.constant 0.000000e+00 : f32
    %21 = vector.broadcast %cst_11 : f32 to vector<4x256xf32>
    %cst_12 = arith.constant 0.000000e+00 : f32
    %22 = vector.broadcast %cst_12 : f32 to vector<4x256xf32>
    %cst_13 = arith.constant 0.000000e+00 : f32
    %23 = vector.broadcast %cst_13 : f32 to vector<4x256xf32>
    %cst_14 = arith.constant 0.000000e+00 : f32
    %24 = vector.broadcast %cst_14 : f32 to vector<4x256xf32>
    %25 = vector.extract_strided_slice %19 {offsets = [0, 111], sizes = [4, 256], strides = [1, 1]} : vector<4x512xf32> to vector<4x256xf32>
    %26 = vector.extract_strided_slice %20 {offsets = [0, 111], sizes = [4, 256], strides = [1, 1]} : vector<4x512xf32> to vector<4x256xf32>
    %27 = vector.extract_strided_slice %6 {offsets = [0, 0], sizes = [4, 1], strides = [1, 1]} : vector<4x37xf32> to vector<4x1xf32>
    %28 = vector.extract_strided_slice %25 {offsets = [0, 0], sizes = [1, 256], strides = [1, 1]} : vector<4x256xf32> to vector<1x256xf32>
    %29 = vector.broadcast %27 : vector<4x1xf32> to vector<4x256xf32>
    %30 = vector.broadcast %28 : vector<1x256xf32> to vector<4x256xf32>
    %31 = arith.mulf %29, %30 : vector<4x256xf32>
    %32 = arith.addf %23, %31 : vector<4x256xf32>
    %33 = vector.extract_strided_slice %26 {offsets = [0, 0], sizes = [1, 256], strides = [1, 1]} : vector<4x256xf32> to vector<1x256xf32>
    %34 = vector.broadcast %27 : vector<4x1xf32> to vector<4x256xf32>
    %35 = vector.broadcast %33 : vector<1x256xf32> to vector<4x256xf32>
    %36 = arith.mulf %34, %35 : vector<4x256xf32>
    %37 = arith.addf %24, %36 : vector<4x256xf32>
    %38 = vector.extract_strided_slice %6 {offsets = [0, 1], sizes = [4, 1], strides = [1, 1]} : vector<4x37xf32> to vector<4x1xf32>
    %39 = vector.extract_strided_slice %25 {offsets = [1, 0], sizes = [1, 256], strides = [1, 1]} : vector<4x256xf32> to vector<1x256xf32>
    %40 = vector.broadcast %38 : vector<4x1xf32> to vector<4x256xf32>
    %41 = vector.broadcast %39 : vector<1x256xf32> to vector<4x256xf32>
    %42 = arith.mulf %40, %41 : vector<4x256xf32>
    %43 = arith.addf %32, %42 : vector<4x256xf32>
    %44 = vector.extract_strided_slice %26 {offsets = [1, 0], sizes = [1, 256], strides = [1, 1]} : vector<4x256xf32> to vector<1x256xf32>
    %45 = vector.broadcast %38 : vector<4x1xf32> to vector<4x256xf32>
    %46 = vector.broadcast %44 : vector<1x256xf32> to vector<4x256xf32>
    %47 = arith.mulf %45, %46 : vector<4x256xf32>
    %48 = arith.addf %37, %47 : vector<4x256xf32>
    %49 = vector.extract_strided_slice %6 {offsets = [0, 2], sizes = [4, 1], strides = [1, 1]} : vector<4x37xf32> to vector<4x1xf32>
    %50 = vector.extract_strided_slice %25 {offsets = [2, 0], sizes = [1, 256], strides = [1, 1]} : vector<4x256xf32> to vector<1x256xf32>
    %51 = vector.broadcast %49 : vector<4x1xf32> to vector<4x256xf32>
    %52 = vector.broadcast %50 : vector<1x256xf32> to vector<4x256xf32>
    %53 = arith.mulf %51, %52 : vector<4x256xf32>
    %54 = arith.addf %43, %53 : vector<4x256xf32>
    %55 = vector.extract_strided_slice %26 {offsets = [2, 0], sizes = [1, 256], strides = [1, 1]} : vector<4x256xf32> to vector<1x256xf32>
    %56 = vector.broadcast %49 : vector<4x1xf32> to vector<4x256xf32>
    %57 = vector.broadcast %55 : vector<1x256xf32> to vector<4x256xf32>
    %58 = arith.mulf %56, %57 : vector<4x256xf32>
    %59 = arith.addf %48, %58 : vector<4x256xf32>
    %60 = vector.extract_strided_slice %6 {offsets = [0, 3], sizes = [4, 1], strides = [1, 1]} : vector<4x37xf32> to vector<4x1xf32>
    %61 = vector.extract_strided_slice %25 {offsets = [3, 0], sizes = [1, 256], strides = [1, 1]} : vector<4x256xf32> to vector<1x256xf32>
    %62 = vector.broadcast %60 : vector<4x1xf32> to vector<4x256xf32>
    %63 = vector.broadcast %61 : vector<1x256xf32> to vector<4x256xf32>
    %64 = arith.mulf %62, %63 : vector<4x256xf32>
    %65 = arith.addf %54, %64 : vector<4x256xf32>
    %66 = vector.extract_strided_slice %26 {offsets = [3, 0], sizes = [1, 256], strides = [1, 1]} : vector<4x256xf32> to vector<1x256xf32>
    %67 = vector.broadcast %60 : vector<4x1xf32> to vector<4x256xf32>
    %68 = vector.broadcast %66 : vector<1x256xf32> to vector<4x256xf32>
    %69 = arith.mulf %67, %68 : vector<4x256xf32>
    %70 = arith.addf %59, %69 : vector<4x256xf32>
    %71 = vector.extract_strided_slice %19 {offsets = [0, 127], sizes = [4, 256], strides = [1, 1]} : vector<4x512xf32> to vector<4x256xf32>
    %72 = vector.extract_strided_slice %20 {offsets = [0, 127], sizes = [4, 256], strides = [1, 1]} : vector<4x512xf32> to vector<4x256xf32>
    %73 = vector.extract_strided_slice %6 {offsets = [0, 12], sizes = [4, 1], strides = [1, 1]} : vector<4x37xf32> to vector<4x1xf32>
    %74 = vector.extract_strided_slice %71 {offsets = [0, 0], sizes = [1, 256], strides = [1, 1]} : vector<4x256xf32> to vector<1x256xf32>
    %75 = vector.broadcast %73 : vector<4x1xf32> to vector<4x256xf32>
    %76 = vector.broadcast %74 : vector<1x256xf32> to vector<4x256xf32>
    %77 = arith.mulf %75, %76 : vector<4x256xf32>
    %78 = arith.addf %65, %77 : vector<4x256xf32>
    %79 = vector.extract_strided_slice %72 {offsets = [0, 0], sizes = [1, 256], strides = [1, 1]} : vector<4x256xf32> to vector<1x256xf32>
    %80 = vector.broadcast %73 : vector<4x1xf32> to vector<4x256xf32>
    %81 = vector.broadcast %79 : vector<1x256xf32> to vector<4x256xf32>
    %82 = arith.mulf %80, %81 : vector<4x256xf32>
    %83 = arith.addf %70, %82 : vector<4x256xf32>
    %84 = vector.extract_strided_slice %6 {offsets = [0, 13], sizes = [4, 1], strides = [1, 1]} : vector<4x37xf32> to vector<4x1xf32>
    %85 = vector.extract_strided_slice %71 {offsets = [1, 0], sizes = [1, 256], strides = [1, 1]} : vector<4x256xf32> to vector<1x256xf32>
    %86 = vector.broadcast %84 : vector<4x1xf32> to vector<4x256xf32>
    %87 = vector.broadcast %85 : vector<1x256xf32> to vector<4x256xf32>
    %88 = arith.mulf %86, %87 : vector<4x256xf32>
    %89 = arith.addf %78, %88 : vector<4x256xf32>
    %90 = vector.extract_strided_slice %72 {offsets = [1, 0], sizes = [1, 256], strides = [1, 1]} : vector<4x256xf32> to vector<1x256xf32>
    %91 = vector.broadcast %84 : vector<4x1xf32> to vector<4x256xf32>
    %92 = vector.broadcast %90 : vector<1x256xf32> to vector<4x256xf32>
    %93 = arith.mulf %91, %92 : vector<4x256xf32>
    %94 = arith.addf %83, %93 : vector<4x256xf32>
    %95 = vector.extract_strided_slice %6 {offsets = [0, 14], sizes = [4, 1], strides = [1, 1]} : vector<4x37xf32> to vector<4x1xf32>
    %96 = vector.extract_strided_slice %71 {offsets = [2, 0], sizes = [1, 256], strides = [1, 1]} : vector<4x256xf32> to vector<1x256xf32>
    %97 = vector.broadcast %95 : vector<4x1xf32> to vector<4x256xf32>
    %98 = vector.broadcast %96 : vector<1x256xf32> to vector<4x256xf32>
    %99 = arith.mulf %97, %98 : vector<4x256xf32>
    %100 = arith.addf %89, %99 : vector<4x256xf32>
    %101 = vector.extract_strided_slice %72 {offsets = [2, 0], sizes = [1, 256], strides = [1, 1]} : vector<4x256xf32> to vector<1x256xf32>
    %102 = vector.broadcast %95 : vector<4x1xf32> to vector<4x256xf32>
    %103 = vector.broadcast %101 : vector<1x256xf32> to vector<4x256xf32>
    %104 = arith.mulf %102, %103 : vector<4x256xf32>
    %105 = arith.addf %94, %104 : vector<4x256xf32>
    %106 = vector.extract_strided_slice %6 {offsets = [0, 15], sizes = [4, 1], strides = [1, 1]} : vector<4x37xf32> to vector<4x1xf32>
    %107 = vector.extract_strided_slice %71 {offsets = [3, 0], sizes = [1, 256], strides = [1, 1]} : vector<4x256xf32> to vector<1x256xf32>
    %108 = vector.broadcast %106 : vector<4x1xf32> to vector<4x256xf32>
    %109 = vector.broadcast %107 : vector<1x256xf32> to vector<4x256xf32>
    %110 = arith.mulf %108, %109 : vector<4x256xf32>
    %111 = arith.addf %100, %110 : vector<4x256xf32>
    %112 = vector.extract_strided_slice %72 {offsets = [3, 0], sizes = [1, 256], strides = [1, 1]} : vector<4x256xf32> to vector<1x256xf32>
    %113 = vector.broadcast %106 : vector<4x1xf32> to vector<4x256xf32>
    %114 = vector.broadcast %112 : vector<1x256xf32> to vector<4x256xf32>
    %115 = arith.mulf %113, %114 : vector<4x256xf32>
    %116 = arith.addf %105, %115 : vector<4x256xf32>
    %117 = vector.extract_strided_slice %19 {offsets = [0, 143], sizes = [4, 256], strides = [1, 1]} : vector<4x512xf32> to vector<4x256xf32>
    %118 = vector.extract_strided_slice %20 {offsets = [0, 143], sizes = [4, 256], strides = [1, 1]} : vector<4x512xf32> to vector<4x256xf32>
    %119 = vector.extract_strided_slice %6 {offsets = [0, 24], sizes = [4, 1], strides = [1, 1]} : vector<4x37xf32> to vector<4x1xf32>
    %120 = vector.extract_strided_slice %117 {offsets = [0, 0], sizes = [1, 256], strides = [1, 1]} : vector<4x256xf32> to vector<1x256xf32>
    %121 = vector.broadcast %119 : vector<4x1xf32> to vector<4x256xf32>
    %122 = vector.broadcast %120 : vector<1x256xf32> to vector<4x256xf32>
    %123 = arith.mulf %121, %122 : vector<4x256xf32>
    %124 = arith.addf %111, %123 : vector<4x256xf32>
    %125 = vector.extract_strided_slice %118 {offsets = [0, 0], sizes = [1, 256], strides = [1, 1]} : vector<4x256xf32> to vector<1x256xf32>
    %126 = vector.broadcast %119 : vector<4x1xf32> to vector<4x256xf32>
    %127 = vector.broadcast %125 : vector<1x256xf32> to vector<4x256xf32>
    %128 = arith.mulf %126, %127 : vector<4x256xf32>
    %129 = arith.addf %116, %128 : vector<4x256xf32>
    %130 = vector.extract_strided_slice %6 {offsets = [0, 25], sizes = [4, 1], strides = [1, 1]} : vector<4x37xf32> to vector<4x1xf32>
    %131 = vector.extract_strided_slice %117 {offsets = [1, 0], sizes = [1, 256], strides = [1, 1]} : vector<4x256xf32> to vector<1x256xf32>
    %132 = vector.broadcast %130 : vector<4x1xf32> to vector<4x256xf32>
    %133 = vector.broadcast %131 : vector<1x256xf32> to vector<4x256xf32>
    %134 = arith.mulf %132, %133 : vector<4x256xf32>
    %135 = arith.addf %124, %134 : vector<4x256xf32>
    %136 = vector.extract_strided_slice %118 {offsets = [1, 0], sizes = [1, 256], strides = [1, 1]} : vector<4x256xf32> to vector<1x256xf32>
    %137 = vector.broadcast %130 : vector<4x1xf32> to vector<4x256xf32>
    %138 = vector.broadcast %136 : vector<1x256xf32> to vector<4x256xf32>
    %139 = arith.mulf %137, %138 : vector<4x256xf32>
    %140 = arith.addf %129, %139 : vector<4x256xf32>
    %141 = vector.extract_strided_slice %6 {offsets = [0, 26], sizes = [4, 1], strides = [1, 1]} : vector<4x37xf32> to vector<4x1xf32>
    %142 = vector.extract_strided_slice %117 {offsets = [2, 0], sizes = [1, 256], strides = [1, 1]} : vector<4x256xf32> to vector<1x256xf32>
    %143 = vector.broadcast %141 : vector<4x1xf32> to vector<4x256xf32>
    %144 = vector.broadcast %142 : vector<1x256xf32> to vector<4x256xf32>
    %145 = arith.mulf %143, %144 : vector<4x256xf32>
    %146 = arith.addf %135, %145 : vector<4x256xf32>
    %147 = vector.extract_strided_slice %118 {offsets = [2, 0], sizes = [1, 256], strides = [1, 1]} : vector<4x256xf32> to vector<1x256xf32>
    %148 = vector.broadcast %141 : vector<4x1xf32> to vector<4x256xf32>
    %149 = vector.broadcast %147 : vector<1x256xf32> to vector<4x256xf32>
    %150 = arith.mulf %148, %149 : vector<4x256xf32>
    %151 = arith.addf %140, %150 : vector<4x256xf32>
    %152 = vector.extract_strided_slice %6 {offsets = [0, 27], sizes = [4, 1], strides = [1, 1]} : vector<4x37xf32> to vector<4x1xf32>
    %153 = vector.extract_strided_slice %117 {offsets = [3, 0], sizes = [1, 256], strides = [1, 1]} : vector<4x256xf32> to vector<1x256xf32>
    %154 = vector.broadcast %152 : vector<4x1xf32> to vector<4x256xf32>
    %155 = vector.broadcast %153 : vector<1x256xf32> to vector<4x256xf32>
    %156 = arith.mulf %154, %155 : vector<4x256xf32>
    %157 = arith.addf %146, %156 : vector<4x256xf32>
    %158 = vector.extract_strided_slice %118 {offsets = [3, 0], sizes = [1, 256], strides = [1, 1]} : vector<4x256xf32> to vector<1x256xf32>
    %159 = vector.broadcast %152 : vector<4x1xf32> to vector<4x256xf32>
    %160 = vector.broadcast %158 : vector<1x256xf32> to vector<4x256xf32>
    %161 = arith.mulf %159, %160 : vector<4x256xf32>
    %162 = arith.addf %151, %161 : vector<4x256xf32>
    %163 = vector.broadcast %14 : vector<1x256xf32> to vector<4x256xf32>
    %164 = arith.mulf %163, %157 : vector<4x256xf32>
    %165 = arith.addf %21, %164 : vector<4x256xf32>
    %166 = vector.broadcast %14 : vector<1x256xf32> to vector<4x256xf32>
    %167 = arith.mulf %166, %162 : vector<4x256xf32>
    %168 = arith.addf %22, %167 : vector<4x256xf32>
    %cst_15 = arith.constant 0.000000e+00 : f32
    %169 = vector.broadcast %cst_15 : f32 to vector<4x256xf32>
    %cst_16 = arith.constant 0.000000e+00 : f32
    %170 = vector.broadcast %cst_16 : f32 to vector<4x256xf32>
    %171 = vector.extract_strided_slice %19 {offsets = [0, 112], sizes = [4, 256], strides = [1, 1]} : vector<4x512xf32> to vector<4x256xf32>
    %172 = vector.extract_strided_slice %20 {offsets = [0, 112], sizes = [4, 256], strides = [1, 1]} : vector<4x512xf32> to vector<4x256xf32>
    %173 = vector.extract_strided_slice %6 {offsets = [0, 4], sizes = [4, 1], strides = [1, 1]} : vector<4x37xf32> to vector<4x1xf32>
    %174 = vector.extract_strided_slice %171 {offsets = [0, 0], sizes = [1, 256], strides = [1, 1]} : vector<4x256xf32> to vector<1x256xf32>
    %175 = vector.broadcast %173 : vector<4x1xf32> to vector<4x256xf32>
    %176 = vector.broadcast %174 : vector<1x256xf32> to vector<4x256xf32>
    %177 = arith.mulf %175, %176 : vector<4x256xf32>
    %178 = arith.addf %169, %177 : vector<4x256xf32>
    %179 = vector.extract_strided_slice %172 {offsets = [0, 0], sizes = [1, 256], strides = [1, 1]} : vector<4x256xf32> to vector<1x256xf32>
    %180 = vector.broadcast %173 : vector<4x1xf32> to vector<4x256xf32>
    %181 = vector.broadcast %179 : vector<1x256xf32> to vector<4x256xf32>
    %182 = arith.mulf %180, %181 : vector<4x256xf32>
    %183 = arith.addf %170, %182 : vector<4x256xf32>
    %184 = vector.extract_strided_slice %6 {offsets = [0, 5], sizes = [4, 1], strides = [1, 1]} : vector<4x37xf32> to vector<4x1xf32>
    %185 = vector.extract_strided_slice %171 {offsets = [1, 0], sizes = [1, 256], strides = [1, 1]} : vector<4x256xf32> to vector<1x256xf32>
    %186 = vector.broadcast %184 : vector<4x1xf32> to vector<4x256xf32>
    %187 = vector.broadcast %185 : vector<1x256xf32> to vector<4x256xf32>
    %188 = arith.mulf %186, %187 : vector<4x256xf32>
    %189 = arith.addf %178, %188 : vector<4x256xf32>
    %190 = vector.extract_strided_slice %172 {offsets = [1, 0], sizes = [1, 256], strides = [1, 1]} : vector<4x256xf32> to vector<1x256xf32>
    %191 = vector.broadcast %184 : vector<4x1xf32> to vector<4x256xf32>
    %192 = vector.broadcast %190 : vector<1x256xf32> to vector<4x256xf32>
    %193 = arith.mulf %191, %192 : vector<4x256xf32>
    %194 = arith.addf %183, %193 : vector<4x256xf32>
    %195 = vector.extract_strided_slice %6 {offsets = [0, 6], sizes = [4, 1], strides = [1, 1]} : vector<4x37xf32> to vector<4x1xf32>
    %196 = vector.extract_strided_slice %171 {offsets = [2, 0], sizes = [1, 256], strides = [1, 1]} : vector<4x256xf32> to vector<1x256xf32>
    %197 = vector.broadcast %195 : vector<4x1xf32> to vector<4x256xf32>
    %198 = vector.broadcast %196 : vector<1x256xf32> to vector<4x256xf32>
    %199 = arith.mulf %197, %198 : vector<4x256xf32>
    %200 = arith.addf %189, %199 : vector<4x256xf32>
    %201 = vector.extract_strided_slice %172 {offsets = [2, 0], sizes = [1, 256], strides = [1, 1]} : vector<4x256xf32> to vector<1x256xf32>
    %202 = vector.broadcast %195 : vector<4x1xf32> to vector<4x256xf32>
    %203 = vector.broadcast %201 : vector<1x256xf32> to vector<4x256xf32>
    %204 = arith.mulf %202, %203 : vector<4x256xf32>
    %205 = arith.addf %194, %204 : vector<4x256xf32>
    %206 = vector.extract_strided_slice %6 {offsets = [0, 7], sizes = [4, 1], strides = [1, 1]} : vector<4x37xf32> to vector<4x1xf32>
    %207 = vector.extract_strided_slice %171 {offsets = [3, 0], sizes = [1, 256], strides = [1, 1]} : vector<4x256xf32> to vector<1x256xf32>
    %208 = vector.broadcast %206 : vector<4x1xf32> to vector<4x256xf32>
    %209 = vector.broadcast %207 : vector<1x256xf32> to vector<4x256xf32>
    %210 = arith.mulf %208, %209 : vector<4x256xf32>
    %211 = arith.addf %200, %210 : vector<4x256xf32>
    %212 = vector.extract_strided_slice %172 {offsets = [3, 0], sizes = [1, 256], strides = [1, 1]} : vector<4x256xf32> to vector<1x256xf32>
    %213 = vector.broadcast %206 : vector<4x1xf32> to vector<4x256xf32>
    %214 = vector.broadcast %212 : vector<1x256xf32> to vector<4x256xf32>
    %215 = arith.mulf %213, %214 : vector<4x256xf32>
    %216 = arith.addf %205, %215 : vector<4x256xf32>
    %217 = vector.extract_strided_slice %19 {offsets = [0, 128], sizes = [4, 256], strides = [1, 1]} : vector<4x512xf32> to vector<4x256xf32>
    %218 = vector.extract_strided_slice %20 {offsets = [0, 128], sizes = [4, 256], strides = [1, 1]} : vector<4x512xf32> to vector<4x256xf32>
    %219 = vector.extract_strided_slice %6 {offsets = [0, 16], sizes = [4, 1], strides = [1, 1]} : vector<4x37xf32> to vector<4x1xf32>
    %220 = vector.extract_strided_slice %217 {offsets = [0, 0], sizes = [1, 256], strides = [1, 1]} : vector<4x256xf32> to vector<1x256xf32>
    %221 = vector.broadcast %219 : vector<4x1xf32> to vector<4x256xf32>
    %222 = vector.broadcast %220 : vector<1x256xf32> to vector<4x256xf32>
    %223 = arith.mulf %221, %222 : vector<4x256xf32>
    %224 = arith.addf %211, %223 : vector<4x256xf32>
    %225 = vector.extract_strided_slice %218 {offsets = [0, 0], sizes = [1, 256], strides = [1, 1]} : vector<4x256xf32> to vector<1x256xf32>
    %226 = vector.broadcast %219 : vector<4x1xf32> to vector<4x256xf32>
    %227 = vector.broadcast %225 : vector<1x256xf32> to vector<4x256xf32>
    %228 = arith.mulf %226, %227 : vector<4x256xf32>
    %229 = arith.addf %216, %228 : vector<4x256xf32>
    %230 = vector.extract_strided_slice %6 {offsets = [0, 17], sizes = [4, 1], strides = [1, 1]} : vector<4x37xf32> to vector<4x1xf32>
    %231 = vector.extract_strided_slice %217 {offsets = [1, 0], sizes = [1, 256], strides = [1, 1]} : vector<4x256xf32> to vector<1x256xf32>
    %232 = vector.broadcast %230 : vector<4x1xf32> to vector<4x256xf32>
    %233 = vector.broadcast %231 : vector<1x256xf32> to vector<4x256xf32>
    %234 = arith.mulf %232, %233 : vector<4x256xf32>
    %235 = arith.addf %224, %234 : vector<4x256xf32>
    %236 = vector.extract_strided_slice %218 {offsets = [1, 0], sizes = [1, 256], strides = [1, 1]} : vector<4x256xf32> to vector<1x256xf32>
    %237 = vector.broadcast %230 : vector<4x1xf32> to vector<4x256xf32>
    %238 = vector.broadcast %236 : vector<1x256xf32> to vector<4x256xf32>
    %239 = arith.mulf %237, %238 : vector<4x256xf32>
    %240 = arith.addf %229, %239 : vector<4x256xf32>
    %241 = vector.extract_strided_slice %6 {offsets = [0, 18], sizes = [4, 1], strides = [1, 1]} : vector<4x37xf32> to vector<4x1xf32>
    %242 = vector.extract_strided_slice %217 {offsets = [2, 0], sizes = [1, 256], strides = [1, 1]} : vector<4x256xf32> to vector<1x256xf32>
    %243 = vector.broadcast %241 : vector<4x1xf32> to vector<4x256xf32>
    %244 = vector.broadcast %242 : vector<1x256xf32> to vector<4x256xf32>
    %245 = arith.mulf %243, %244 : vector<4x256xf32>
    %246 = arith.addf %235, %245 : vector<4x256xf32>
    %247 = vector.extract_strided_slice %218 {offsets = [2, 0], sizes = [1, 256], strides = [1, 1]} : vector<4x256xf32> to vector<1x256xf32>
    %248 = vector.broadcast %241 : vector<4x1xf32> to vector<4x256xf32>
    %249 = vector.broadcast %247 : vector<1x256xf32> to vector<4x256xf32>
    %250 = arith.mulf %248, %249 : vector<4x256xf32>
    %251 = arith.addf %240, %250 : vector<4x256xf32>
    %252 = vector.extract_strided_slice %6 {offsets = [0, 19], sizes = [4, 1], strides = [1, 1]} : vector<4x37xf32> to vector<4x1xf32>
    %253 = vector.extract_strided_slice %217 {offsets = [3, 0], sizes = [1, 256], strides = [1, 1]} : vector<4x256xf32> to vector<1x256xf32>
    %254 = vector.broadcast %252 : vector<4x1xf32> to vector<4x256xf32>
    %255 = vector.broadcast %253 : vector<1x256xf32> to vector<4x256xf32>
    %256 = arith.mulf %254, %255 : vector<4x256xf32>
    %257 = arith.addf %246, %256 : vector<4x256xf32>
    %258 = vector.extract_strided_slice %218 {offsets = [3, 0], sizes = [1, 256], strides = [1, 1]} : vector<4x256xf32> to vector<1x256xf32>
    %259 = vector.broadcast %252 : vector<4x1xf32> to vector<4x256xf32>
    %260 = vector.broadcast %258 : vector<1x256xf32> to vector<4x256xf32>
    %261 = arith.mulf %259, %260 : vector<4x256xf32>
    %262 = arith.addf %251, %261 : vector<4x256xf32>
    %263 = vector.extract_strided_slice %19 {offsets = [0, 144], sizes = [4, 256], strides = [1, 1]} : vector<4x512xf32> to vector<4x256xf32>
    %264 = vector.extract_strided_slice %20 {offsets = [0, 144], sizes = [4, 256], strides = [1, 1]} : vector<4x512xf32> to vector<4x256xf32>
    %265 = vector.extract_strided_slice %6 {offsets = [0, 28], sizes = [4, 1], strides = [1, 1]} : vector<4x37xf32> to vector<4x1xf32>
    %266 = vector.extract_strided_slice %263 {offsets = [0, 0], sizes = [1, 256], strides = [1, 1]} : vector<4x256xf32> to vector<1x256xf32>
    %267 = vector.broadcast %265 : vector<4x1xf32> to vector<4x256xf32>
    %268 = vector.broadcast %266 : vector<1x256xf32> to vector<4x256xf32>
    %269 = arith.mulf %267, %268 : vector<4x256xf32>
    %270 = arith.addf %257, %269 : vector<4x256xf32>
    %271 = vector.extract_strided_slice %264 {offsets = [0, 0], sizes = [1, 256], strides = [1, 1]} : vector<4x256xf32> to vector<1x256xf32>
    %272 = vector.broadcast %265 : vector<4x1xf32> to vector<4x256xf32>
    %273 = vector.broadcast %271 : vector<1x256xf32> to vector<4x256xf32>
    %274 = arith.mulf %272, %273 : vector<4x256xf32>
    %275 = arith.addf %262, %274 : vector<4x256xf32>
    %276 = vector.extract_strided_slice %6 {offsets = [0, 29], sizes = [4, 1], strides = [1, 1]} : vector<4x37xf32> to vector<4x1xf32>
    %277 = vector.extract_strided_slice %263 {offsets = [1, 0], sizes = [1, 256], strides = [1, 1]} : vector<4x256xf32> to vector<1x256xf32>
    %278 = vector.broadcast %276 : vector<4x1xf32> to vector<4x256xf32>
    %279 = vector.broadcast %277 : vector<1x256xf32> to vector<4x256xf32>
    %280 = arith.mulf %278, %279 : vector<4x256xf32>
    %281 = arith.addf %270, %280 : vector<4x256xf32>
    %282 = vector.extract_strided_slice %264 {offsets = [1, 0], sizes = [1, 256], strides = [1, 1]} : vector<4x256xf32> to vector<1x256xf32>
    %283 = vector.broadcast %276 : vector<4x1xf32> to vector<4x256xf32>
    %284 = vector.broadcast %282 : vector<1x256xf32> to vector<4x256xf32>
    %285 = arith.mulf %283, %284 : vector<4x256xf32>
    %286 = arith.addf %275, %285 : vector<4x256xf32>
    %287 = vector.extract_strided_slice %6 {offsets = [0, 30], sizes = [4, 1], strides = [1, 1]} : vector<4x37xf32> to vector<4x1xf32>
    %288 = vector.extract_strided_slice %263 {offsets = [2, 0], sizes = [1, 256], strides = [1, 1]} : vector<4x256xf32> to vector<1x256xf32>
    %289 = vector.broadcast %287 : vector<4x1xf32> to vector<4x256xf32>
    %290 = vector.broadcast %288 : vector<1x256xf32> to vector<4x256xf32>
    %291 = arith.mulf %289, %290 : vector<4x256xf32>
    %292 = arith.addf %281, %291 : vector<4x256xf32>
    %293 = vector.extract_strided_slice %264 {offsets = [2, 0], sizes = [1, 256], strides = [1, 1]} : vector<4x256xf32> to vector<1x256xf32>
    %294 = vector.broadcast %287 : vector<4x1xf32> to vector<4x256xf32>
    %295 = vector.broadcast %293 : vector<1x256xf32> to vector<4x256xf32>
    %296 = arith.mulf %294, %295 : vector<4x256xf32>
    %297 = arith.addf %286, %296 : vector<4x256xf32>
    %298 = vector.extract_strided_slice %6 {offsets = [0, 31], sizes = [4, 1], strides = [1, 1]} : vector<4x37xf32> to vector<4x1xf32>
    %299 = vector.extract_strided_slice %263 {offsets = [3, 0], sizes = [1, 256], strides = [1, 1]} : vector<4x256xf32> to vector<1x256xf32>
    %300 = vector.broadcast %298 : vector<4x1xf32> to vector<4x256xf32>
    %301 = vector.broadcast %299 : vector<1x256xf32> to vector<4x256xf32>
    %302 = arith.mulf %300, %301 : vector<4x256xf32>
    %303 = arith.addf %292, %302 : vector<4x256xf32>
    %304 = vector.extract_strided_slice %264 {offsets = [3, 0], sizes = [1, 256], strides = [1, 1]} : vector<4x256xf32> to vector<1x256xf32>
    %305 = vector.broadcast %298 : vector<4x1xf32> to vector<4x256xf32>
    %306 = vector.broadcast %304 : vector<1x256xf32> to vector<4x256xf32>
    %307 = arith.mulf %305, %306 : vector<4x256xf32>
    %308 = arith.addf %297, %307 : vector<4x256xf32>
    %309 = arith.addf %165, %303 : vector<4x256xf32>
    %310 = arith.addf %168, %308 : vector<4x256xf32>
    %cst_17 = arith.constant 0.000000e+00 : f32
    %311 = vector.broadcast %cst_17 : f32 to vector<4x256xf32>
    %cst_18 = arith.constant 0.000000e+00 : f32
    %312 = vector.broadcast %cst_18 : f32 to vector<4x256xf32>
    %313 = vector.extract_strided_slice %19 {offsets = [0, 113], sizes = [4, 256], strides = [1, 1]} : vector<4x512xf32> to vector<4x256xf32>
    %314 = vector.extract_strided_slice %20 {offsets = [0, 113], sizes = [4, 256], strides = [1, 1]} : vector<4x512xf32> to vector<4x256xf32>
    %315 = vector.extract_strided_slice %6 {offsets = [0, 8], sizes = [4, 1], strides = [1, 1]} : vector<4x37xf32> to vector<4x1xf32>
    %316 = vector.extract_strided_slice %313 {offsets = [0, 0], sizes = [1, 256], strides = [1, 1]} : vector<4x256xf32> to vector<1x256xf32>
    %317 = vector.broadcast %315 : vector<4x1xf32> to vector<4x256xf32>
    %318 = vector.broadcast %316 : vector<1x256xf32> to vector<4x256xf32>
    %319 = arith.mulf %317, %318 : vector<4x256xf32>
    %320 = arith.addf %311, %319 : vector<4x256xf32>
    %321 = vector.extract_strided_slice %314 {offsets = [0, 0], sizes = [1, 256], strides = [1, 1]} : vector<4x256xf32> to vector<1x256xf32>
    %322 = vector.broadcast %315 : vector<4x1xf32> to vector<4x256xf32>
    %323 = vector.broadcast %321 : vector<1x256xf32> to vector<4x256xf32>
    %324 = arith.mulf %322, %323 : vector<4x256xf32>
    %325 = arith.addf %312, %324 : vector<4x256xf32>
    %326 = vector.extract_strided_slice %6 {offsets = [0, 9], sizes = [4, 1], strides = [1, 1]} : vector<4x37xf32> to vector<4x1xf32>
    %327 = vector.extract_strided_slice %313 {offsets = [1, 0], sizes = [1, 256], strides = [1, 1]} : vector<4x256xf32> to vector<1x256xf32>
    %328 = vector.broadcast %326 : vector<4x1xf32> to vector<4x256xf32>
    %329 = vector.broadcast %327 : vector<1x256xf32> to vector<4x256xf32>
    %330 = arith.mulf %328, %329 : vector<4x256xf32>
    %331 = arith.addf %320, %330 : vector<4x256xf32>
    %332 = vector.extract_strided_slice %314 {offsets = [1, 0], sizes = [1, 256], strides = [1, 1]} : vector<4x256xf32> to vector<1x256xf32>
    %333 = vector.broadcast %326 : vector<4x1xf32> to vector<4x256xf32>
    %334 = vector.broadcast %332 : vector<1x256xf32> to vector<4x256xf32>
    %335 = arith.mulf %333, %334 : vector<4x256xf32>
    %336 = arith.addf %325, %335 : vector<4x256xf32>
    %337 = vector.extract_strided_slice %6 {offsets = [0, 10], sizes = [4, 1], strides = [1, 1]} : vector<4x37xf32> to vector<4x1xf32>
    %338 = vector.extract_strided_slice %313 {offsets = [2, 0], sizes = [1, 256], strides = [1, 1]} : vector<4x256xf32> to vector<1x256xf32>
    %339 = vector.broadcast %337 : vector<4x1xf32> to vector<4x256xf32>
    %340 = vector.broadcast %338 : vector<1x256xf32> to vector<4x256xf32>
    %341 = arith.mulf %339, %340 : vector<4x256xf32>
    %342 = arith.addf %331, %341 : vector<4x256xf32>
    %343 = vector.extract_strided_slice %314 {offsets = [2, 0], sizes = [1, 256], strides = [1, 1]} : vector<4x256xf32> to vector<1x256xf32>
    %344 = vector.broadcast %337 : vector<4x1xf32> to vector<4x256xf32>
    %345 = vector.broadcast %343 : vector<1x256xf32> to vector<4x256xf32>
    %346 = arith.mulf %344, %345 : vector<4x256xf32>
    %347 = arith.addf %336, %346 : vector<4x256xf32>
    %348 = vector.extract_strided_slice %6 {offsets = [0, 11], sizes = [4, 1], strides = [1, 1]} : vector<4x37xf32> to vector<4x1xf32>
    %349 = vector.extract_strided_slice %313 {offsets = [3, 0], sizes = [1, 256], strides = [1, 1]} : vector<4x256xf32> to vector<1x256xf32>
    %350 = vector.broadcast %348 : vector<4x1xf32> to vector<4x256xf32>
    %351 = vector.broadcast %349 : vector<1x256xf32> to vector<4x256xf32>
    %352 = arith.mulf %350, %351 : vector<4x256xf32>
    %353 = arith.addf %342, %352 : vector<4x256xf32>
    %354 = vector.extract_strided_slice %314 {offsets = [3, 0], sizes = [1, 256], strides = [1, 1]} : vector<4x256xf32> to vector<1x256xf32>
    %355 = vector.broadcast %348 : vector<4x1xf32> to vector<4x256xf32>
    %356 = vector.broadcast %354 : vector<1x256xf32> to vector<4x256xf32>
    %357 = arith.mulf %355, %356 : vector<4x256xf32>
    %358 = arith.addf %347, %357 : vector<4x256xf32>
    %359 = vector.extract_strided_slice %19 {offsets = [0, 129], sizes = [4, 256], strides = [1, 1]} : vector<4x512xf32> to vector<4x256xf32>
    %360 = vector.extract_strided_slice %20 {offsets = [0, 129], sizes = [4, 256], strides = [1, 1]} : vector<4x512xf32> to vector<4x256xf32>
    %361 = vector.extract_strided_slice %6 {offsets = [0, 20], sizes = [4, 1], strides = [1, 1]} : vector<4x37xf32> to vector<4x1xf32>
    %362 = vector.extract_strided_slice %359 {offsets = [0, 0], sizes = [1, 256], strides = [1, 1]} : vector<4x256xf32> to vector<1x256xf32>
    %363 = vector.broadcast %361 : vector<4x1xf32> to vector<4x256xf32>
    %364 = vector.broadcast %362 : vector<1x256xf32> to vector<4x256xf32>
    %365 = arith.mulf %363, %364 : vector<4x256xf32>
    %366 = arith.addf %353, %365 : vector<4x256xf32>
    %367 = vector.extract_strided_slice %360 {offsets = [0, 0], sizes = [1, 256], strides = [1, 1]} : vector<4x256xf32> to vector<1x256xf32>
    %368 = vector.broadcast %361 : vector<4x1xf32> to vector<4x256xf32>
    %369 = vector.broadcast %367 : vector<1x256xf32> to vector<4x256xf32>
    %370 = arith.mulf %368, %369 : vector<4x256xf32>
    %371 = arith.addf %358, %370 : vector<4x256xf32>
    %372 = vector.extract_strided_slice %6 {offsets = [0, 21], sizes = [4, 1], strides = [1, 1]} : vector<4x37xf32> to vector<4x1xf32>
    %373 = vector.extract_strided_slice %359 {offsets = [1, 0], sizes = [1, 256], strides = [1, 1]} : vector<4x256xf32> to vector<1x256xf32>
    %374 = vector.broadcast %372 : vector<4x1xf32> to vector<4x256xf32>
    %375 = vector.broadcast %373 : vector<1x256xf32> to vector<4x256xf32>
    %376 = arith.mulf %374, %375 : vector<4x256xf32>
    %377 = arith.addf %366, %376 : vector<4x256xf32>
    %378 = vector.extract_strided_slice %360 {offsets = [1, 0], sizes = [1, 256], strides = [1, 1]} : vector<4x256xf32> to vector<1x256xf32>
    %379 = vector.broadcast %372 : vector<4x1xf32> to vector<4x256xf32>
    %380 = vector.broadcast %378 : vector<1x256xf32> to vector<4x256xf32>
    %381 = arith.mulf %379, %380 : vector<4x256xf32>
    %382 = arith.addf %371, %381 : vector<4x256xf32>
    %383 = vector.extract_strided_slice %6 {offsets = [0, 22], sizes = [4, 1], strides = [1, 1]} : vector<4x37xf32> to vector<4x1xf32>
    %384 = vector.extract_strided_slice %359 {offsets = [2, 0], sizes = [1, 256], strides = [1, 1]} : vector<4x256xf32> to vector<1x256xf32>
    %385 = vector.broadcast %383 : vector<4x1xf32> to vector<4x256xf32>
    %386 = vector.broadcast %384 : vector<1x256xf32> to vector<4x256xf32>
    %387 = arith.mulf %385, %386 : vector<4x256xf32>
    %388 = arith.addf %377, %387 : vector<4x256xf32>
    %389 = vector.extract_strided_slice %360 {offsets = [2, 0], sizes = [1, 256], strides = [1, 1]} : vector<4x256xf32> to vector<1x256xf32>
    %390 = vector.broadcast %383 : vector<4x1xf32> to vector<4x256xf32>
    %391 = vector.broadcast %389 : vector<1x256xf32> to vector<4x256xf32>
    %392 = arith.mulf %390, %391 : vector<4x256xf32>
    %393 = arith.addf %382, %392 : vector<4x256xf32>
    %394 = vector.extract_strided_slice %6 {offsets = [0, 23], sizes = [4, 1], strides = [1, 1]} : vector<4x37xf32> to vector<4x1xf32>
    %395 = vector.extract_strided_slice %359 {offsets = [3, 0], sizes = [1, 256], strides = [1, 1]} : vector<4x256xf32> to vector<1x256xf32>
    %396 = vector.broadcast %394 : vector<4x1xf32> to vector<4x256xf32>
    %397 = vector.broadcast %395 : vector<1x256xf32> to vector<4x256xf32>
    %398 = arith.mulf %396, %397 : vector<4x256xf32>
    %399 = arith.addf %388, %398 : vector<4x256xf32>
    %400 = vector.extract_strided_slice %360 {offsets = [3, 0], sizes = [1, 256], strides = [1, 1]} : vector<4x256xf32> to vector<1x256xf32>
    %401 = vector.broadcast %394 : vector<4x1xf32> to vector<4x256xf32>
    %402 = vector.broadcast %400 : vector<1x256xf32> to vector<4x256xf32>
    %403 = arith.mulf %401, %402 : vector<4x256xf32>
    %404 = arith.addf %393, %403 : vector<4x256xf32>
    %405 = vector.extract_strided_slice %19 {offsets = [0, 145], sizes = [4, 256], strides = [1, 1]} : vector<4x512xf32> to vector<4x256xf32>
    %406 = vector.extract_strided_slice %20 {offsets = [0, 145], sizes = [4, 256], strides = [1, 1]} : vector<4x512xf32> to vector<4x256xf32>
    %407 = vector.extract_strided_slice %6 {offsets = [0, 32], sizes = [4, 1], strides = [1, 1]} : vector<4x37xf32> to vector<4x1xf32>
    %408 = vector.extract_strided_slice %405 {offsets = [0, 0], sizes = [1, 256], strides = [1, 1]} : vector<4x256xf32> to vector<1x256xf32>
    %409 = vector.broadcast %407 : vector<4x1xf32> to vector<4x256xf32>
    %410 = vector.broadcast %408 : vector<1x256xf32> to vector<4x256xf32>
    %411 = arith.mulf %409, %410 : vector<4x256xf32>
    %412 = arith.addf %399, %411 : vector<4x256xf32>
    %413 = vector.extract_strided_slice %406 {offsets = [0, 0], sizes = [1, 256], strides = [1, 1]} : vector<4x256xf32> to vector<1x256xf32>
    %414 = vector.broadcast %407 : vector<4x1xf32> to vector<4x256xf32>
    %415 = vector.broadcast %413 : vector<1x256xf32> to vector<4x256xf32>
    %416 = arith.mulf %414, %415 : vector<4x256xf32>
    %417 = arith.addf %404, %416 : vector<4x256xf32>
    %418 = vector.extract_strided_slice %6 {offsets = [0, 33], sizes = [4, 1], strides = [1, 1]} : vector<4x37xf32> to vector<4x1xf32>
    %419 = vector.extract_strided_slice %405 {offsets = [1, 0], sizes = [1, 256], strides = [1, 1]} : vector<4x256xf32> to vector<1x256xf32>
    %420 = vector.broadcast %418 : vector<4x1xf32> to vector<4x256xf32>
    %421 = vector.broadcast %419 : vector<1x256xf32> to vector<4x256xf32>
    %422 = arith.mulf %420, %421 : vector<4x256xf32>
    %423 = arith.addf %412, %422 : vector<4x256xf32>
    %424 = vector.extract_strided_slice %406 {offsets = [1, 0], sizes = [1, 256], strides = [1, 1]} : vector<4x256xf32> to vector<1x256xf32>
    %425 = vector.broadcast %418 : vector<4x1xf32> to vector<4x256xf32>
    %426 = vector.broadcast %424 : vector<1x256xf32> to vector<4x256xf32>
    %427 = arith.mulf %425, %426 : vector<4x256xf32>
    %428 = arith.addf %417, %427 : vector<4x256xf32>
    %429 = vector.extract_strided_slice %6 {offsets = [0, 34], sizes = [4, 1], strides = [1, 1]} : vector<4x37xf32> to vector<4x1xf32>
    %430 = vector.extract_strided_slice %405 {offsets = [2, 0], sizes = [1, 256], strides = [1, 1]} : vector<4x256xf32> to vector<1x256xf32>
    %431 = vector.broadcast %429 : vector<4x1xf32> to vector<4x256xf32>
    %432 = vector.broadcast %430 : vector<1x256xf32> to vector<4x256xf32>
    %433 = arith.mulf %431, %432 : vector<4x256xf32>
    %434 = arith.addf %423, %433 : vector<4x256xf32>
    %435 = vector.extract_strided_slice %406 {offsets = [2, 0], sizes = [1, 256], strides = [1, 1]} : vector<4x256xf32> to vector<1x256xf32>
    %436 = vector.broadcast %429 : vector<4x1xf32> to vector<4x256xf32>
    %437 = vector.broadcast %435 : vector<1x256xf32> to vector<4x256xf32>
    %438 = arith.mulf %436, %437 : vector<4x256xf32>
    %439 = arith.addf %428, %438 : vector<4x256xf32>
    %440 = vector.extract_strided_slice %6 {offsets = [0, 35], sizes = [4, 1], strides = [1, 1]} : vector<4x37xf32> to vector<4x1xf32>
    %441 = vector.extract_strided_slice %405 {offsets = [3, 0], sizes = [1, 256], strides = [1, 1]} : vector<4x256xf32> to vector<1x256xf32>
    %442 = vector.broadcast %440 : vector<4x1xf32> to vector<4x256xf32>
    %443 = vector.broadcast %441 : vector<1x256xf32> to vector<4x256xf32>
    %444 = arith.mulf %442, %443 : vector<4x256xf32>
    %445 = arith.addf %434, %444 : vector<4x256xf32>
    %446 = vector.extract_strided_slice %406 {offsets = [3, 0], sizes = [1, 256], strides = [1, 1]} : vector<4x256xf32> to vector<1x256xf32>
    %447 = vector.broadcast %440 : vector<4x1xf32> to vector<4x256xf32>
    %448 = vector.broadcast %446 : vector<1x256xf32> to vector<4x256xf32>
    %449 = arith.mulf %447, %448 : vector<4x256xf32>
    %450 = arith.addf %439, %449 : vector<4x256xf32>
    %451 = vector.broadcast %18 : vector<1x256xf32> to vector<4x256xf32>
    %452 = arith.mulf %451, %445 : vector<4x256xf32>
    %453 = arith.addf %309, %452 : vector<4x256xf32>
    %454 = vector.broadcast %18 : vector<1x256xf32> to vector<4x256xf32>
    %455 = arith.mulf %454, %450 : vector<4x256xf32>
    %456 = arith.addf %310, %455 : vector<4x256xf32>
    %457 = vector.broadcast %7 : vector<4x1xf32> to vector<4x256xf32>
    %458 = arith.addf %453, %457 : vector<4x256xf32>
    %cst_19 = arith.constant 0.000000e+00 : f32
    %459 = vector.broadcast %cst_19 : f32 to vector<4x256xf32>
    %460 = arith.cmpf ogt, %458, %459 : vector<4x256xf32>
    %cst_20 = arith.constant 0.00999999977 : f32
    %461 = vector.broadcast %cst_20 : f32 to vector<4x256xf32>
    %462 = arith.mulf %461, %458 : vector<4x256xf32>
    %463 = arith.select %460, %458, %462 : vector<4x256xi1>, vector<4x256xf32>
    %464 = vector.extract_strided_slice %0 {offsets = [0, 0], sizes = [4, 256], strides = [1, 1]} : vector<8x256xf32> to vector<4x256xf32>
    %465 = arith.addf %464, %463 : vector<4x256xf32>
    %c0_21 = arith.constant 0 : index
    %c0_22 = arith.constant 0 : index
    %466 = vector.load %arg3[%c0_21, %c0_22] : memref<8x256xf32, #tpu.memory_space<vmem>>, vector<4x256xf32>
    tpu.vector_store %arg3[%c0_21, %c0_22], %465 {strides = array<i32>} : memref<8x256xf32, #tpu.memory_space<vmem>>, vector<4x256xf32>,
    %467 = vector.broadcast %7 : vector<4x1xf32> to vector<4x256xf32>
    %468 = arith.addf %456, %467 : vector<4x256xf32>
    %cst_23 = arith.constant 0.000000e+00 : f32
    %469 = vector.broadcast %cst_23 : f32 to vector<4x256xf32>
    %470 = arith.cmpf ogt, %468, %469 : vector<4x256xf32>
    %cst_24 = arith.constant 0.00999999977 : f32
    %471 = vector.broadcast %cst_24 : f32 to vector<4x256xf32>
    %472 = arith.mulf %471, %468 : vector<4x256xf32>
    %473 = arith.select %470, %468, %472 : vector<4x256xi1>, vector<4x256xf32>
    %474 = vector.extract_strided_slice %0 {offsets = [4, 0], sizes = [4, 256], strides = [1, 1]} : vector<8x256xf32> to vector<4x256xf32>
    %475 = arith.addf %474, %473 : vector<4x256xf32>
    %c4_25 = arith.constant 4 : index
    %c0_26 = arith.constant 0 : index
    %476 = vector.load %arg3[%c4_25, %c0_26] : memref<8x256xf32, #tpu.memory_space<vmem>>, vector<4x256xf32>
    tpu.vector_store %arg3[%c4_25, %c0_26], %475 {strides = array<i32>} : memref<8x256xf32, #tpu.memory_space<vmem>>, vector<4x256xf32>,
    return
  }
  func.func @transform_0(%arg0: i32) -> (i32, i32) {
    %c0_i32 = arith.constant 0 : i32
    %c0_i32_0 = arith.constant 0 : i32
    return %arg0, %c0_i32 : i32, i32
  }
  func.func @transform_1(%arg0: i32) -> (i32, i32) {
    %c0_i32 = arith.constant 0 : i32
    %c0_i32_0 = arith.constant 0 : i32
    %c0_i32_1 = arith.constant 0 : i32
    return %c0_i32, %c0_i32_0 : i32, i32
  }
  func.func @transform_2(%arg0: i32) -> (i32, i32) {
    %c0_i32 = arith.constant 0 : i32
    %c0_i32_0 = arith.constant 0 : i32
    return %arg0, %c0_i32 : i32, i32
  }
}

</mosaic_0001>

<llo_original>
// kernel: tpu_custom_call.1
$region0: #{tpu_custom_call.1}
  #allocation0 [shape = 'u32[]', space=smem, size = 0x4, offset = 0x4, fixed_abs, tag = 'smem constant byte address 0x4 - core index']
  #allocation1 [shape = 'u32[144,128]{1,0:T(1,128)}', space=vmem, size = 0x12000, scoped, tag = 'internal scratch']
  #allocation2 [shape = 'f32[8,512]{1,0:T(8,128)}', space=vmem, size = 0x4000, scoped, tag = 'scratch operand']
  %s0 = inlined_call_operand.hbm [shape: f32[8,256], index: 0, kind: input, shape index: {}]
  %s1 = inlined_call_operand.hbm [shape: f32[4,37], index: 1, kind: input, shape index: {}]
  %s2 = inlined_call_operand.hbm [shape: f32[8,256], index: 2, kind: output, shape index: {}]
  %s3 = sld [smem:[#allocation0]]
  $region26: #{tpu_custom_call.1} parent=0
    _
  %s5 = ssub.s32 1, %s3
  %s6 = scalar_select 0, %s5, %s3
  $region1: #{tpu_custom_call.1} parent=0
    #allocation3 [shape = 'u8[8192]{0}', space=vmem, size = 0x2000, scoped, tag = 'input window, operand 0, single buffered']
    #allocation4 [shape = 's32[1]{0}', space=sflag, size = 0x4, scoped, tag = 'scoped memory for tpu_custom_call.1']
    #allocation5 [shape = 's32[1]{0}', space=sflag, size = 0x4, scoped, tag = 'scoped memory for tpu_custom_call.1']
    #allocation6 [shape = 'u8[2048]{0}', space=vmem, size = 0x800, scoped, tag = 'input window, operand 1, single buffered']
    #allocation7 [shape = 's32[1]{0}', space=sflag, size = 0x4, scoped, tag = 'scoped memory for tpu_custom_call.1']
    #allocation8 [shape = 'u8[8192]{0}', space=vmem, size = 0x2000, scoped, tag = 'output window, operand 0, single buffered']
    %7 = vsyncpa [#allocation4], 0
    %8 = vsyncpa [#allocation7], 0
    %9 = vsyncpa [#allocation5], 0
    // Predicated region
    $region2: #{tpu_custom_call.1} parent=1 // pred_check
      _
    $region3: #{tpu_custom_call.1} parent=1 // pred_check_branch
      %11 = sbr.rel (0) target = $region5
    $region4: #{tpu_custom_call.1} parent=1 // pred_region
      %s13 = ssub.s32 256, 256
      %14 = vsyncadd [#allocation4], %s13
      %s16 = sshll.u32 [#allocation3], 4
      %s17 = int_to_ptr.vmem [resolvable:$true] %s16
      %19 = dma.hbm_to_vmem [thread:$0]  %s0, 256, %s17, [#allocation4]
    $region5: #{tpu_custom_call.1} parent=1 // pred_fallthru
      _
    // Predicated region
    $region6: #{tpu_custom_call.1} parent=1 // pred_check
      _
    $region7: #{tpu_custom_call.1} parent=1 // pred_check_branch
      %21 = sbr.rel (0) target = $region9
    $region8: #{tpu_custom_call.1} parent=1 // pred_region
      %s23 = ssub.s32 64, 64
      %24 = vsyncadd [#allocation7], %s23
      %s26 = sshll.u32 [#allocation6], 4
      %s27 = int_to_ptr.vmem [resolvable:$true] %s26
      %29 = dma.hbm_to_vmem [thread:$0]  %s1, 64, %s27, [#allocation7]
    $region9: #{tpu_custom_call.1} parent=1 // pred_fallthru
      _
    // Predicated region
    $region10: #{tpu_custom_call.1} parent=1 // pred_check
      _
    $region11: #{tpu_custom_call.1} parent=1 // pred_check_branch
      %31 = sbr.rel (0) target = $region13
    $region12: #{tpu_custom_call.1} parent=1 // pred_region
      %32 = dma.done [#allocation4], 256
    $region13: #{tpu_custom_call.1} parent=1 // pred_fallthru
      _
    // Predicated region
    $region14: #{tpu_custom_call.1} parent=1 // pred_check
      _
    $region15: #{tpu_custom_call.1} parent=1 // pred_check_branch
      %34 = sbr.rel (0) target = $region17
    $region16: #{tpu_custom_call.1} parent=1 // pred_region
      %35 = dma.done [#allocation7], 64
    $region17: #{tpu_custom_call.1} parent=1 // pred_fallthru
      _
    %v36 = vld [vmem:[#allocation3] sm:$0xff]
    %v37 = vld [vmem:[#allocation3 + $0x8] sm:$0xff]
    %38 = vst [vmem:[#allocation2] sm:$0xff] 0.0
    %39 = vst [vmem:[#allocation2 + $0x18] sm:$0xff] 0.0
    %40 = vst [vmem:[#allocation2 + $0x8] sm:$0xff] %v36
    %41 = vst [vmem:[#allocation2 + $0x10] sm:$0xff] %v37
    %v42 = vld [vmem:[#allocation6] sm:$0xf]
    %v43 = vlaneseq
    %v44 = vand.u32 %v43, 127
    %v45 = vadd.s32 %v44, 128
    %v46 = vand.u32 %v44, 15
    %v47 = vand.u32 %v45, 15
    %vm48 = vcmp.ge.s32.totalorder %v46, 1
    %vm49 = vcmp.ge.s32.totalorder %v47, 1
    %v50 = vsel %vm48, 1, 0
    %v51 = vsel %vm49, 1, 0
    %v52 = vcvt.s32.f32 %v50
    %v53 = vcvt.s32.f32 %v51
    %vm54 = vcmp.le.s32.totalorder %v46, 14
    %vm55 = vcmp.le.s32.totalorder %v47, 14
    %v56 = vsel %vm54, 1, 0
    %v57 = vsel %vm55, 1, 0
    %v58 = vcvt.s32.f32 %v56
    %v59 = vcvt.s32.f32 %v57
    %v60 = vld [vmem:[#allocation2] sm:$0xf]
    %v61 = vld [vmem:[#allocation2 + $0x8] sm:$0xf]
    %v62 = vld [vmem:[#allocation2 + $0x10] sm:$0xf]
    %v63 = vld [vmem:[#allocation2 + $0x18] sm:$0xf]
    %v64 = vld [vmem:[#allocation2] sm:$0xf0]
    %v65 = vld [vmem:[#allocation2 + $0x8] sm:$0xf0]
    %v66 = vld [vmem:[#allocation2 + $0x10] sm:$0xf0]
    %v67 = vld [vmem:[#allocation2 + $0x18] sm:$0xf0]
    %69 = vset.pattern.permute.xlu0 0
    %70 = vperm.xlu0 %69, %v42
    %v71 = vpop.permute.xlu0 %70
    %v73 = vlaneseq
    %v74 = vshrl.u32 %v73, 7
    %v75 = vsub.s32 0, %v74
    %v76 = vrot.slane %v60, %v75
    %v77 = vlaneseq
    %v78 = vshrl.u32 %v77, 7
    %v79 = vsub.s32 0, %v78
    %v80 = vrot.slane %v61, %v79
    %v81 = vlaneseq
    %v82 = vshrl.u32 %v81, 7
    %v83 = vsub.s32 0, %v82
    %v84 = vrot.slane %v62, %v83
    %v85 = vmul.f32 %v71, %v76
    %v86 = vmul.f32 %v71, %v80
    %v87 = vmul.f32 %v71, %v84
    %v88 = vadd.f32 %v85, 0.0
    %v89 = vadd.f32 %v86, 0.0
    %v90 = vadd.f32 %v87, 0.0
    %v91 = vlaneseq
    %v92 = vshrl.u32 %v91, 7
    %v93 = vsub.s32 4, %v92
    %v94 = vrot.slane %v64, %v93
    %v95 = vlaneseq
    %v96 = vshrl.u32 %v95, 7
    %v97 = vsub.s32 4, %v96
    %v98 = vrot.slane %v65, %v97
    %v99 = vlaneseq
    %v100 = vshrl.u32 %v99, 7
    %v101 = vsub.s32 4, %v100
    %v102 = vrot.slane %v66, %v101
    %v103 = vmul.f32 %v71, %v94
    %v104 = vmul.f32 %v71, %v98
    %v105 = vmul.f32 %v71, %v102
    %v106 = vadd.f32 %v103, 0.0
    %v107 = vadd.f32 %v104, 0.0
    %v108 = vadd.f32 %v105, 0.0
    %109 = vset.pattern.permute.xlu0 1
    %110 = vperm.xlu0 %109, %v42
    %v111 = vpop.permute.xlu0 %110
    %v113 = vlaneseq
    %v114 = vshrl.u32 %v113, 7
    %v115 = vsub.s32 1, %v114
    %v116 = vrot.slane %v60, %v115
    %v117 = vlaneseq
    %v118 = vshrl.u32 %v117, 7
    %v119 = vsub.s32 1, %v118
    %v120 = vrot.slane %v61, %v119
    %v121 = vlaneseq
    %v122 = vshrl.u32 %v121, 7
    %v123 = vsub.s32 1, %v122
    %v124 = vrot.slane %v62, %v123
    %v125 = vmul.f32 %v111, %v116
    %v126 = vmul.f32 %v111, %v120
    %v127 = vmul.f32 %v111, %v124
    %v128 = vadd.f32 %v88, %v125
    %v129 = vadd.f32 %v89, %v126
    %v130 = vadd.f32 %v90, %v127
    %v131 = vlaneseq
    %v132 = vshrl.u32 %v131, 7
    %v133 = vsub.s32 5, %v132
    %v134 = vrot.slane %v64, %v133
    %v135 = vlaneseq
    %v136 = vshrl.u32 %v135, 7
    %v137 = vsub.s32 5, %v136
    %v138 = vrot.slane %v65, %v137
    %v139 = vlaneseq
    %v140 = vshrl.u32 %v139, 7
    %v141 = vsub.s32 5, %v140
    %v142 = vrot.slane %v66, %v141
    %v143 = vmul.f32 %v111, %v134
    %v144 = vmul.f32 %v111, %v138
    %v145 = vmul.f32 %v111, %v142
    %v146 = vadd.f32 %v106, %v143
    %v147 = vadd.f32 %v107, %v144
    %v148 = vadd.f32 %v108, %v145
    %149 = vset.pattern.permute.xlu0 2
    %150 = vperm.xlu0 %149, %v42
    %v151 = vpop.permute.xlu0 %150
    %v153 = vlaneseq
    %v154 = vshrl.u32 %v153, 7
    %v155 = vsub.s32 2, %v154
    %v156 = vrot.slane %v60, %v155
    %v157 = vlaneseq
    %v158 = vshrl.u32 %v157, 7
    %v159 = vsub.s32 2, %v158
    %v160 = vrot.slane %v61, %v159
    %v161 = vlaneseq
    %v162 = vshrl.u32 %v161, 7
    %v163 = vsub.s32 2, %v162
    %v164 = vrot.slane %v62, %v163
    %v165 = vmul.f32 %v151, %v156
    %v166 = vmul.f32 %v151, %v160
    %v167 = vmul.f32 %v151, %v164
    %v168 = vadd.f32 %v128, %v165
    %v169 = vadd.f32 %v129, %v166
    %v170 = vadd.f32 %v130, %v167
    %v171 = vlaneseq
    %v172 = vshrl.u32 %v171, 7
    %v173 = vsub.s32 6, %v172
    %v174 = vrot.slane %v64, %v173
    %v175 = vlaneseq
    %v176 = vshrl.u32 %v175, 7
    %v177 = vsub.s32 6, %v176
    %v178 = vrot.slane %v65, %v177
    %v179 = vlaneseq
    %v180 = vshrl.u32 %v179, 7
    %v181 = vsub.s32 6, %v180
    %v182 = vrot.slane %v66, %v181
    %v183 = vmul.f32 %v151, %v174
    %v184 = vmul.f32 %v151, %v178
    %v185 = vmul.f32 %v151, %v182
    %v186 = vadd.f32 %v146, %v183
    %v187 = vadd.f32 %v147, %v184
    %v188 = vadd.f32 %v148, %v185
    %189 = vset.pattern.permute.xlu0 3
    %190 = vperm.xlu0 %189, %v42
    %v191 = vpop.permute.xlu0 %190
    %v193 = vlaneseq
    %v194 = vshrl.u32 %v193, 7
    %v195 = vsub.s32 3, %v194
    %v196 = vrot.slane %v60, %v195
    %v197 = vlaneseq
    %v198 = vshrl.u32 %v197, 7
    %v199 = vsub.s32 3, %v198
    %v200 = vrot.slane %v61, %v199
    %v201 = vlaneseq
    %v202 = vshrl.u32 %v201, 7
    %v203 = vsub.s32 3, %v202
    %v204 = vrot.slane %v62, %v203
    %v205 = vmul.f32 %v191, %v196
    %v206 = vmul.f32 %v191, %v200
    %v207 = vmul.f32 %v191, %v204
    %v208 = vadd.f32 %v168, %v205
    %v209 = vadd.f32 %v169, %v206
    %v210 = vadd.f32 %v170, %v207
    %v211 = vlaneseq
    %v212 = vshrl.u32 %v211, 7
    %v213 = vsub.s32 7, %v212
    %v214 = vrot.slane %v64, %v213
    %v215 = vlaneseq
    %v216 = vshrl.u32 %v215, 7
    %v217 = vsub.s32 7, %v216
    %v218 = vrot.slane %v65, %v217
    %v219 = vlaneseq
    %v220 = vshrl.u32 %v219, 7
    %v221 = vsub.s32 7, %v220
    %v222 = vrot.slane %v66, %v221
    %v223 = vmul.f32 %v191, %v214
    %v224 = vmul.f32 %v191, %v218
    %v225 = vmul.f32 %v191, %v222
    %v226 = vadd.f32 %v186, %v223
    %v227 = vadd.f32 %v187, %v224
    %v228 = vadd.f32 %v188, %v225
    %229 = vset.pattern.permute.xlu0 12
    %230 = vperm.xlu0 %229, %v42
    %v231 = vpop.permute.xlu0 %230
    %v233 = vmul.f32 %v231, %v76
    %v234 = vmul.f32 %v231, %v80
    %v235 = vmul.f32 %v231, %v84
    %239 = vrot.lane.b32.xlu0 %v233, 112
    %v240 = vpop.permute.xlu0 %239
    %241 = vrot.lane.b32.xlu0 %v234, 112
    %v242 = vpop.permute.xlu0 %241
    %243 = vrot.lane.b32.xlu0 %v235, 112
    %v244 = vpop.permute.xlu0 %243
    %vm245 = vcmask 916480
    %v246 = vsel %vm245, %v240, %v242
    %v247 = vsel %vm245, %v242, %v244
    %v251 = vadd.f32 %v208, %v246
    %v252 = vadd.f32 %v209, %v247
    %v253 = vadd.f32 %v210, %v244
    %v254 = vmul.f32 %v231, %v94
    %v255 = vmul.f32 %v231, %v98
    %v256 = vmul.f32 %v231, %v102
    %260 = vrot.lane.b32.xlu0 %v254, 112
    %v261 = vpop.permute.xlu0 %260
    %262 = vrot.lane.b32.xlu0 %v255, 112
    %v263 = vpop.permute.xlu0 %262
    %264 = vrot.lane.b32.xlu0 %v256, 112
    %v265 = vpop.permute.xlu0 %264
    %v266 = vsel %vm245, %v261, %v263
    %v267 = vsel %vm245, %v263, %v265
    %v271 = vadd.f32 %v226, %v266
    %v272 = vadd.f32 %v227, %v267
    %v273 = vadd.f32 %v228, %v265
    %274 = vset.pattern.permute.xlu0 13
    %275 = vperm.xlu0 %274, %v42
    %v276 = vpop.permute.xlu0 %275
    %v278 = vmul.f32 %v276, %v116
    %v279 = vmul.f32 %v276, %v120
    %v280 = vmul.f32 %v276, %v124
    %284 = vrot.lane.b32.xlu0 %v278, 112
    %v285 = vpop.permute.xlu0 %284
    %286 = vrot.lane.b32.xlu0 %v279, 112
    %v287 = vpop.permute.xlu0 %286
    %288 = vrot.lane.b32.xlu0 %v280, 112
    %v289 = vpop.permute.xlu0 %288
    %v290 = vsel %vm245, %v285, %v287
    %v291 = vsel %vm245, %v287, %v289
    %v295 = vadd.f32 %v251, %v290
    %v296 = vadd.f32 %v252, %v291
    %v297 = vadd.f32 %v253, %v289
    %v298 = vmul.f32 %v276, %v134
    %v299 = vmul.f32 %v276, %v138
    %v300 = vmul.f32 %v276, %v142
    %304 = vrot.lane.b32.xlu0 %v298, 112
    %v305 = vpop.permute.xlu0 %304
    %306 = vrot.lane.b32.xlu0 %v299, 112
    %v307 = vpop.permute.xlu0 %306
    %308 = vrot.lane.b32.xlu0 %v300, 112
    %v309 = vpop.permute.xlu0 %308
    %v310 = vsel %vm245, %v305, %v307
    %v311 = vsel %vm245, %v307, %v309
    %v315 = vadd.f32 %v271, %v310
    %v316 = vadd.f32 %v272, %v311
    %v317 = vadd.f32 %v273, %v309
    %318 = vset.pattern.permute.xlu0 14
    %319 = vperm.xlu0 %318, %v42
    %v320 = vpop.permute.xlu0 %319
    %v322 = vmul.f32 %v320, %v156
    %v323 = vmul.f32 %v320, %v160
    %v324 = vmul.f32 %v320, %v164
    %328 = vrot.lane.b32.xlu0 %v322, 112
    %v329 = vpop.permute.xlu0 %328
    %330 = vrot.lane.b32.xlu0 %v323, 112
    %v331 = vpop.permute.xlu0 %330
    %332 = vrot.lane.b32.xlu0 %v324, 112
    %v333 = vpop.permute.xlu0 %332
    %v334 = vsel %vm245, %v329, %v331
    %v335 = vsel %vm245, %v331, %v333
    %v339 = vadd.f32 %v295, %v334
    %v340 = vadd.f32 %v296, %v335
    %v341 = vadd.f32 %v297, %v333
    %v342 = vmul.f32 %v320, %v174
    %v343 = vmul.f32 %v320, %v178
    %v344 = vmul.f32 %v320, %v182
    %348 = vrot.lane.b32.xlu0 %v342, 112
    %v349 = vpop.permute.xlu0 %348
    %350 = vrot.lane.b32.xlu0 %v343, 112
    %v351 = vpop.permute.xlu0 %350
    %352 = vrot.lane.b32.xlu0 %v344, 112
    %v353 = vpop.permute.xlu0 %352
    %v354 = vsel %vm245, %v349, %v351
    %v355 = vsel %vm245, %v351, %v353
    %v359 = vadd.f32 %v315, %v354
    %v360 = vadd.f32 %v316, %v355
    %v361 = vadd.f32 %v317, %v353
    %362 = vset.pattern.permute.xlu0 15
    %363 = vperm.xlu0 %362, %v42
    %v364 = vpop.permute.xlu0 %363
    %v366 = vmul.f32 %v364, %v196
    %v367 = vmul.f32 %v364, %v200
    %v368 = vmul.f32 %v364, %v204
    %372 = vrot.lane.b32.xlu0 %v366, 112
    %v373 = vpop.permute.xlu0 %372
    %374 = vrot.lane.b32.xlu0 %v367, 112
    %v375 = vpop.permute.xlu0 %374
    %376 = vrot.lane.b32.xlu0 %v368, 112
    %v377 = vpop.permute.xlu0 %376
    %v378 = vsel %vm245, %v373, %v375
    %v379 = vsel %vm245, %v375, %v377
    %v383 = vadd.f32 %v339, %v378
    %v384 = vadd.f32 %v340, %v379
    %v385 = vadd.f32 %v341, %v377
    %v386 = vmul.f32 %v364, %v214
    %v387 = vmul.f32 %v364, %v218
    %v388 = vmul.f32 %v364, %v222
    %392 = vrot.lane.b32.xlu0 %v386, 112
    %v393 = vpop.permute.xlu0 %392
    %394 = vrot.lane.b32.xlu0 %v387, 112
    %v395 = vpop.permute.xlu0 %394
    %396 = vrot.lane.b32.xlu0 %v388, 112
    %v397 = vpop.permute.xlu0 %396
    %v398 = vsel %vm245, %v393, %v395
    %v399 = vsel %vm245, %v395, %v397
    %v403 = vadd.f32 %v359, %v398
    %v404 = vadd.f32 %v360, %v399
    %v405 = vadd.f32 %v361, %v397
    %406 = vset.pattern.permute.xlu0 24
    %407 = vperm.xlu0 %406, %v42
    %v408 = vpop.permute.xlu0 %407
    %v410 = vlaneseq
    %v411 = vshrl.u32 %v410, 7
    %v412 = vsub.s32 0, %v411
    %v413 = vrot.slane %v63, %v412
    %v414 = vmul.f32 %v408, %v80
    %v415 = vmul.f32 %v408, %v84
    %v416 = vmul.f32 %v408, %v413
    %420 = vrot.lane.b32.xlu0 %v414, 96
    %v421 = vpop.permute.xlu0 %420
    %422 = vrot.lane.b32.xlu0 %v415, 96
    %v423 = vpop.permute.xlu0 %422
    %424 = vrot.lane.b32.xlu0 %v416, 96
    %v425 = vpop.permute.xlu0 %424
    %vm426 = vcmask 785408
    %v427 = vsel %vm426, %v421, %v423
    %v428 = vsel %vm426, %v423, %v425
    %v432 = vadd.f32 %v383, %v421
    %v433 = vadd.f32 %v384, %v427
    %v434 = vadd.f32 %v385, %v428
    %v435 = vlaneseq
    %v436 = vshrl.u32 %v435, 7
    %v437 = vsub.s32 4, %v436
    %v438 = vrot.slane %v67, %v437
    %v439 = vmul.f32 %v408, %v98
    %v440 = vmul.f32 %v408, %v102
    %v441 = vmul.f32 %v408, %v438
    %445 = vrot.lane.b32.xlu0 %v439, 96
    %v446 = vpop.permute.xlu0 %445
    %447 = vrot.lane.b32.xlu0 %v440, 96
    %v448 = vpop.permute.xlu0 %447
    %449 = vrot.lane.b32.xlu0 %v441, 96
    %v450 = vpop.permute.xlu0 %449
    %v451 = vsel %vm426, %v446, %v448
    %v452 = vsel %vm426, %v448, %v450
    %v456 = vadd.f32 %v403, %v446
    %v457 = vadd.f32 %v404, %v451
    %v458 = vadd.f32 %v405, %v452
    %459 = vset.pattern.permute.xlu0 25
    %460 = vperm.xlu0 %459, %v42
    %v461 = vpop.permute.xlu0 %460
    %v463 = vlaneseq
    %v464 = vshrl.u32 %v463, 7
    %v465 = vsub.s32 1, %v464
    %v466 = vrot.slane %v63, %v465
    %v467 = vmul.f32 %v461, %v120
    %v468 = vmul.f32 %v461, %v124
    %v469 = vmul.f32 %v461, %v466
    %473 = vrot.lane.b32.xlu0 %v467, 96
    %v474 = vpop.permute.xlu0 %473
    %475 = vrot.lane.b32.xlu0 %v468, 96
    %v476 = vpop.permute.xlu0 %475
    %477 = vrot.lane.b32.xlu0 %v469, 96
    %v478 = vpop.permute.xlu0 %477
    %v479 = vsel %vm426, %v474, %v476
    %v480 = vsel %vm426, %v476, %v478
    %v484 = vadd.f32 %v432, %v474
    %v485 = vadd.f32 %v433, %v479
    %v486 = vadd.f32 %v434, %v480
    %v487 = vlaneseq
    %v488 = vshrl.u32 %v487, 7
    %v489 = vsub.s32 5, %v488
    %v490 = vrot.slane %v67, %v489
    %v491 = vmul.f32 %v461, %v138
    %v492 = vmul.f32 %v461, %v142
    %v493 = vmul.f32 %v461, %v490
    %497 = vrot.lane.b32.xlu0 %v491, 96
    %v498 = vpop.permute.xlu0 %497
    %499 = vrot.lane.b32.xlu0 %v492, 96
    %v500 = vpop.permute.xlu0 %499
    %501 = vrot.lane.b32.xlu0 %v493, 96
    %v502 = vpop.permute.xlu0 %501
    %v503 = vsel %vm426, %v498, %v500
    %v504 = vsel %vm426, %v500, %v502
    %v508 = vadd.f32 %v456, %v498
    %v509 = vadd.f32 %v457, %v503
    %v510 = vadd.f32 %v458, %v504
    %511 = vset.pattern.permute.xlu0 26
    %512 = vperm.xlu0 %511, %v42
    %v513 = vpop.permute.xlu0 %512
    %v515 = vlaneseq
    %v516 = vshrl.u32 %v515, 7
    %v517 = vsub.s32 2, %v516
    %v518 = vrot.slane %v63, %v517
    %v519 = vmul.f32 %v513, %v160
    %v520 = vmul.f32 %v513, %v164
    %v521 = vmul.f32 %v513, %v518
    %525 = vrot.lane.b32.xlu0 %v519, 96
    %v526 = vpop.permute.xlu0 %525
    %527 = vrot.lane.b32.xlu0 %v520, 96
    %v528 = vpop.permute.xlu0 %527
    %529 = vrot.lane.b32.xlu0 %v521, 96
    %v530 = vpop.permute.xlu0 %529
    %v531 = vsel %vm426, %v526, %v528
    %v532 = vsel %vm426, %v528, %v530
    %v536 = vadd.f32 %v484, %v526
    %v537 = vadd.f32 %v485, %v531
    %v538 = vadd.f32 %v486, %v532
    %v539 = vlaneseq
    %v540 = vshrl.u32 %v539, 7
    %v541 = vsub.s32 6, %v540
    %v542 = vrot.slane %v67, %v541
    %v543 = vmul.f32 %v513, %v178
    %v544 = vmul.f32 %v513, %v182
    %v545 = vmul.f32 %v513, %v542
    %549 = vrot.lane.b32.xlu0 %v543, 96
    %v550 = vpop.permute.xlu0 %549
    %551 = vrot.lane.b32.xlu0 %v544, 96
    %v552 = vpop.permute.xlu0 %551
    %553 = vrot.lane.b32.xlu0 %v545, 96
    %v554 = vpop.permute.xlu0 %553
    %v555 = vsel %vm426, %v550, %v552
    %v556 = vsel %vm426, %v552, %v554
    %v560 = vadd.f32 %v508, %v550
    %v561 = vadd.f32 %v509, %v555
    %v562 = vadd.f32 %v510, %v556
    %563 = vset.pattern.permute.xlu0 27
    %564 = vperm.xlu0 %563, %v42
    %v565 = vpop.permute.xlu0 %564
    %v567 = vlaneseq
    %v568 = vshrl.u32 %v567, 7
    %v569 = vsub.s32 3, %v568
    %v570 = vrot.slane %v63, %v569
    %v571 = vmul.f32 %v565, %v200
    %v572 = vmul.f32 %v565, %v204
    %v573 = vmul.f32 %v565, %v570
    %577 = vrot.lane.b32.xlu0 %v571, 96
    %v578 = vpop.permute.xlu0 %577
    %579 = vrot.lane.b32.xlu0 %v572, 96
    %v580 = vpop.permute.xlu0 %579
    %581 = vrot.lane.b32.xlu0 %v573, 96
    %v582 = vpop.permute.xlu0 %581
    %v583 = vsel %vm426, %v578, %v580
    %v584 = vsel %vm426, %v580, %v582
    %v588 = vadd.f32 %v536, %v578
    %v589 = vadd.f32 %v537, %v583
    %v590 = vadd.f32 %v538, %v584
    %v591 = vlaneseq
    %v592 = vshrl.u32 %v591, 7
    %v593 = vsub.s32 7, %v592
    %v594 = vrot.slane %v67, %v593
    %v595 = vmul.f32 %v565, %v218
    %v596 = vmul.f32 %v565, %v222
    %v597 = vmul.f32 %v565, %v594
    %601 = vrot.lane.b32.xlu0 %v595, 96
    %v602 = vpop.permute.xlu0 %601
    %603 = vrot.lane.b32.xlu0 %v596, 96
    %v604 = vpop.permute.xlu0 %603
    %605 = vrot.lane.b32.xlu0 %v597, 96
    %v606 = vpop.permute.xlu0 %605
    %v607 = vsel %vm426, %v602, %v604
    %v608 = vsel %vm426, %v604, %v606
    %v612 = vadd.f32 %v560, %v602
    %v613 = vadd.f32 %v561, %v607
    %v614 = vadd.f32 %v562, %v608
    %618 = vrot.lane.b32.xlu0 %v588, 17
    %v619 = vpop.permute.xlu0 %618
    %620 = vrot.lane.b32.xlu0 %v589, 17
    %v621 = vpop.permute.xlu0 %620
    %622 = vrot.lane.b32.xlu0 %v590, 17
    %v623 = vpop.permute.xlu0 %622
    %vm624 = vcmask 138240
    %v625 = vsel %vm624, %v619, %v621
    %v626 = vsel %vm624, %v621, %v623
    %v629 = vmul.f32 %v52, %v625
    %v630 = vmul.f32 %v53, %v626
    %v631 = vadd.f32 %v629, 0.0
    %v632 = vadd.f32 %v630, 0.0
    %636 = vrot.lane.b32.xlu0 %v612, 17
    %v637 = vpop.permute.xlu0 %636
    %638 = vrot.lane.b32.xlu0 %v613, 17
    %v639 = vpop.permute.xlu0 %638
    %640 = vrot.lane.b32.xlu0 %v614, 17
    %v641 = vpop.permute.xlu0 %640
    %v642 = vsel %vm624, %v637, %v639
    %v643 = vsel %vm624, %v639, %v641
    %v646 = vmul.f32 %v52, %v642
    %v647 = vmul.f32 %v53, %v643
    %v648 = vadd.f32 %v646, 0.0
    %v649 = vadd.f32 %v647, 0.0
    %650 = vset.pattern.permute.xlu0 4
    %651 = vperm.xlu0 %650, %v42
    %v652 = vpop.permute.xlu0 %651
    %v654 = vmul.f32 %v652, %v76
    %v655 = vmul.f32 %v652, %v80
    %v656 = vmul.f32 %v652, %v84
    %v657 = vadd.f32 %v654, 0.0
    %v658 = vadd.f32 %v655, 0.0
    %v659 = vadd.f32 %v656, 0.0
    %v660 = vmul.f32 %v652, %v94
    %v661 = vmul.f32 %v652, %v98
    %v662 = vmul.f32 %v652, %v102
    %v663 = vadd.f32 %v660, 0.0
    %v664 = vadd.f32 %v661, 0.0
    %v665 = vadd.f32 %v662, 0.0
    %666 = vset.pattern.permute.xlu0 5
    %667 = vperm.xlu0 %666, %v42
    %v668 = vpop.permute.xlu0 %667
    %v670 = vmul.f32 %v668, %v116
    %v671 = vmul.f32 %v668, %v120
    %v672 = vmul.f32 %v668, %v124
    %v673 = vadd.f32 %v657, %v670
    %v674 = vadd.f32 %v658, %v671
    %v675 = vadd.f32 %v659, %v672
    %v676 = vmul.f32 %v668, %v134
    %v677 = vmul.f32 %v668, %v138
    %v678 = vmul.f32 %v668, %v142
    %v679 = vadd.f32 %v663, %v676
    %v680 = vadd.f32 %v664, %v677
    %v681 = vadd.f32 %v665, %v678
    %682 = vset.pattern.permute.xlu0 6
    %683 = vperm.xlu0 %682, %v42
    %v684 = vpop.permute.xlu0 %683
    %v686 = vmul.f32 %v684, %v156
    %v687 = vmul.f32 %v684, %v160
    %v688 = vmul.f32 %v684, %v164
    %v689 = vadd.f32 %v673, %v686
    %v690 = vadd.f32 %v674, %v687
    %v691 = vadd.f32 %v675, %v688
    %v692 = vmul.f32 %v684, %v174
    %v693 = vmul.f32 %v684, %v178
    %v694 = vmul.f32 %v684, %v182
    %v695 = vadd.f32 %v679, %v692
    %v696 = vadd.f32 %v680, %v693
    %v697 = vadd.f32 %v681, %v694
    %698 = vset.pattern.permute.xlu0 7
    %699 = vperm.xlu0 %698, %v42
    %v700 = vpop.permute.xlu0 %699
    %v702 = vmul.f32 %v700, %v196
    %v703 = vmul.f32 %v700, %v200
    %v704 = vmul.f32 %v700, %v204
    %v705 = vadd.f32 %v689, %v702
    %v706 = vadd.f32 %v690, %v703
    %v707 = vadd.f32 %v691, %v704
    %v708 = vmul.f32 %v700, %v214
    %v709 = vmul.f32 %v700, %v218
    %v710 = vmul.f32 %v700, %v222
    %v711 = vadd.f32 %v695, %v708
    %v712 = vadd.f32 %v696, %v709
    %v713 = vadd.f32 %v697, %v710
    %714 = vset.pattern.permute.xlu0 16
    %715 = vperm.xlu0 %714, %v42
    %v716 = vpop.permute.xlu0 %715
    %v718 = vmul.f32 %v716, %v80
    %v719 = vmul.f32 %v716, %v84
    %722 = vrot.lane.b32.xlu0 %v718, 112
    %v723 = vpop.permute.xlu0 %722
    %724 = vrot.lane.b32.xlu0 %v719, 112
    %v725 = vpop.permute.xlu0 %724
    %v726 = vsel %vm245, %v723, %v725
    %v730 = vadd.f32 %v705, %v723
    %v731 = vadd.f32 %v706, %v726
    %v732 = vadd.f32 %v707, %v725
    %v733 = vmul.f32 %v716, %v98
    %v734 = vmul.f32 %v716, %v102
    %737 = vrot.lane.b32.xlu0 %v733, 112
    %v738 = vpop.permute.xlu0 %737
    %739 = vrot.lane.b32.xlu0 %v734, 112
    %v740 = vpop.permute.xlu0 %739
    %v741 = vsel %vm245, %v738, %v740
    %v745 = vadd.f32 %v711, %v738
    %v746 = vadd.f32 %v712, %v741
    %v747 = vadd.f32 %v713, %v740
    %748 = vset.pattern.permute.xlu0 17
    %749 = vperm.xlu0 %748, %v42
    %v750 = vpop.permute.xlu0 %749
    %v752 = vmul.f32 %v750, %v120
    %v753 = vmul.f32 %v750, %v124
    %756 = vrot.lane.b32.xlu0 %v752, 112
    %v757 = vpop.permute.xlu0 %756
    %758 = vrot.lane.b32.xlu0 %v753, 112
    %v759 = vpop.permute.xlu0 %758
    %v760 = vsel %vm245, %v757, %v759
    %v764 = vadd.f32 %v730, %v757
    %v765 = vadd.f32 %v731, %v760
    %v766 = vadd.f32 %v732, %v759
    %v767 = vmul.f32 %v750, %v138
    %v768 = vmul.f32 %v750, %v142
    %771 = vrot.lane.b32.xlu0 %v767, 112
    %v772 = vpop.permute.xlu0 %771
    %773 = vrot.lane.b32.xlu0 %v768, 112
    %v774 = vpop.permute.xlu0 %773
    %v775 = vsel %vm245, %v772, %v774
    %v779 = vadd.f32 %v745, %v772
    %v780 = vadd.f32 %v746, %v775
    %v781 = vadd.f32 %v747, %v774
    %782 = vset.pattern.permute.xlu0 18
    %783 = vperm.xlu0 %782, %v42
    %v784 = vpop.permute.xlu0 %783
    %v786 = vmul.f32 %v784, %v160
    %v787 = vmul.f32 %v784, %v164
    %790 = vrot.lane.b32.xlu0 %v786, 112
    %v791 = vpop.permute.xlu0 %790
    %792 = vrot.lane.b32.xlu0 %v787, 112
    %v793 = vpop.permute.xlu0 %792
    %v794 = vsel %vm245, %v791, %v793
    %v798 = vadd.f32 %v764, %v791
    %v799 = vadd.f32 %v765, %v794
    %v800 = vadd.f32 %v766, %v793
    %v801 = vmul.f32 %v784, %v178
    %v802 = vmul.f32 %v784, %v182
    %805 = vrot.lane.b32.xlu0 %v801, 112
    %v806 = vpop.permute.xlu0 %805
    %807 = vrot.lane.b32.xlu0 %v802, 112
    %v808 = vpop.permute.xlu0 %807
    %v809 = vsel %vm245, %v806, %v808
    %v813 = vadd.f32 %v779, %v806
    %v814 = vadd.f32 %v780, %v809
    %v815 = vadd.f32 %v781, %v808
    %816 = vset.pattern.permute.xlu0 19
    %817 = vperm.xlu0 %816, %v42
    %v818 = vpop.permute.xlu0 %817
    %v820 = vmul.f32 %v818, %v200
    %v821 = vmul.f32 %v818, %v204
    %824 = vrot.lane.b32.xlu0 %v820, 112
    %v825 = vpop.permute.xlu0 %824
    %826 = vrot.lane.b32.xlu0 %v821, 112
    %v827 = vpop.permute.xlu0 %826
    %v828 = vsel %vm245, %v825, %v827
    %v832 = vadd.f32 %v798, %v825
    %v833 = vadd.f32 %v799, %v828
    %v834 = vadd.f32 %v800, %v827
    %v835 = vmul.f32 %v818, %v218
    %v836 = vmul.f32 %v818, %v222
    %839 = vrot.lane.b32.xlu0 %v835, 112
    %v840 = vpop.permute.xlu0 %839
    %841 = vrot.lane.b32.xlu0 %v836, 112
    %v842 = vpop.permute.xlu0 %841
    %v843 = vsel %vm245, %v840, %v842
    %v847 = vadd.f32 %v813, %v840
    %v848 = vadd.f32 %v814, %v843
    %v849 = vadd.f32 %v815, %v842
    %850 = vset.pattern.permute.xlu0 28
    %851 = vperm.xlu0 %850, %v42
    %v852 = vpop.permute.xlu0 %851
    %v854 = vmul.f32 %v852, %v80
    %v855 = vmul.f32 %v852, %v84
    %v856 = vmul.f32 %v852, %v413
    %860 = vrot.lane.b32.xlu0 %v854, 96
    %v861 = vpop.permute.xlu0 %860
    %862 = vrot.lane.b32.xlu0 %v855, 96
    %v863 = vpop.permute.xlu0 %862
    %864 = vrot.lane.b32.xlu0 %v856, 96
    %v865 = vpop.permute.xlu0 %864
    %v866 = vsel %vm426, %v861, %v863
    %v867 = vsel %vm426, %v863, %v865
    %v871 = vadd.f32 %v832, %v861
    %v872 = vadd.f32 %v833, %v866
    %v873 = vadd.f32 %v834, %v867
    %v874 = vmul.f32 %v852, %v98
    %v875 = vmul.f32 %v852, %v102
    %v876 = vmul.f32 %v852, %v438
    %880 = vrot.lane.b32.xlu0 %v874, 96
    %v881 = vpop.permute.xlu0 %880
    %882 = vrot.lane.b32.xlu0 %v875, 96
    %v883 = vpop.permute.xlu0 %882
    %884 = vrot.lane.b32.xlu0 %v876, 96
    %v885 = vpop.permute.xlu0 %884
    %v886 = vsel %vm426, %v881, %v883
    %v887 = vsel %vm426, %v883, %v885
    %v891 = vadd.f32 %v847, %v881
    %v892 = vadd.f32 %v848, %v886
    %v893 = vadd.f32 %v849, %v887
    %894 = vset.pattern.permute.xlu0 29
    %895 = vperm.xlu0 %894, %v42
    %v896 = vpop.permute.xlu0 %895
    %v898 = vmul.f32 %v896, %v120
    %v899 = vmul.f32 %v896, %v124
    %v900 = vmul.f32 %v896, %v466
    %904 = vrot.lane.b32.xlu0 %v898, 96
    %v905 = vpop.permute.xlu0 %904
    %906 = vrot.lane.b32.xlu0 %v899, 96
    %v907 = vpop.permute.xlu0 %906
    %908 = vrot.lane.b32.xlu0 %v900, 96
    %v909 = vpop.permute.xlu0 %908
    %v910 = vsel %vm426, %v905, %v907
    %v911 = vsel %vm426, %v907, %v909
    %v915 = vadd.f32 %v871, %v905
    %v916 = vadd.f32 %v872, %v910
    %v917 = vadd.f32 %v873, %v911
    %v918 = vmul.f32 %v896, %v138
    %v919 = vmul.f32 %v896, %v142
    %v920 = vmul.f32 %v896, %v490
    %924 = vrot.lane.b32.xlu0 %v918, 96
    %v925 = vpop.permute.xlu0 %924
    %926 = vrot.lane.b32.xlu0 %v919, 96
    %v927 = vpop.permute.xlu0 %926
    %928 = vrot.lane.b32.xlu0 %v920, 96
    %v929 = vpop.permute.xlu0 %928
    %v930 = vsel %vm426, %v925, %v927
    %v931 = vsel %vm426, %v927, %v929
    %v935 = vadd.f32 %v891, %v925
    %v936 = vadd.f32 %v892, %v930
    %v937 = vadd.f32 %v893, %v931
    %938 = vset.pattern.permute.xlu0 30
    %939 = vperm.xlu0 %938, %v42
    %v940 = vpop.permute.xlu0 %939
    %v942 = vmul.f32 %v940, %v160
    %v943 = vmul.f32 %v940, %v164
    %v944 = vmul.f32 %v940, %v518
    %948 = vrot.lane.b32.xlu0 %v942, 96
    %v949 = vpop.permute.xlu0 %948
    %950 = vrot.lane.b32.xlu0 %v943, 96
    %v951 = vpop.permute.xlu0 %950
    %952 = vrot.lane.b32.xlu0 %v944, 96
    %v953 = vpop.permute.xlu0 %952
    %v954 = vsel %vm426, %v949, %v951
    %v955 = vsel %vm426, %v951, %v953
    %v959 = vadd.f32 %v915, %v949
    %v960 = vadd.f32 %v916, %v954
    %v961 = vadd.f32 %v917, %v955
    %v962 = vmul.f32 %v940, %v178
    %v963 = vmul.f32 %v940, %v182
    %v964 = vmul.f32 %v940, %v542
    %968 = vrot.lane.b32.xlu0 %v962, 96
    %v969 = vpop.permute.xlu0 %968
    %970 = vrot.lane.b32.xlu0 %v963, 96
    %v971 = vpop.permute.xlu0 %970
    %972 = vrot.lane.b32.xlu0 %v964, 96
    %v973 = vpop.permute.xlu0 %972
    %v974 = vsel %vm426, %v969, %v971
    %v975 = vsel %vm426, %v971, %v973
    %v979 = vadd.f32 %v935, %v969
    %v980 = vadd.f32 %v936, %v974
    %v981 = vadd.f32 %v937, %v975
    %982 = vset.pattern.permute.xlu0 31
    %983 = vperm.xlu0 %982, %v42
    %v984 = vpop.permute.xlu0 %983
    %v986 = vmul.f32 %v984, %v200
    %v987 = vmul.f32 %v984, %v204
    %v988 = vmul.f32 %v984, %v570
    %992 = vrot.lane.b32.xlu0 %v986, 96
    %v993 = vpop.permute.xlu0 %992
    %994 = vrot.lane.b32.xlu0 %v987, 96
    %v995 = vpop.permute.xlu0 %994
    %996 = vrot.lane.b32.xlu0 %v988, 96
    %v997 = vpop.permute.xlu0 %996
    %v998 = vsel %vm426, %v993, %v995
    %v999 = vsel %vm426, %v995, %v997
    %v1003 = vadd.f32 %v959, %v993
    %v1004 = vadd.f32 %v960, %v998
    %v1005 = vadd.f32 %v961, %v999
    %v1006 = vmul.f32 %v984, %v218
    %v1007 = vmul.f32 %v984, %v222
    %v1008 = vmul.f32 %v984, %v594
    %1012 = vrot.lane.b32.xlu0 %v1006, 96
    %v1013 = vpop.permute.xlu0 %1012
    %1014 = vrot.lane.b32.xlu0 %v1007, 96
    %v1015 = vpop.permute.xlu0 %1014
    %1016 = vrot.lane.b32.xlu0 %v1008, 96
    %v1017 = vpop.permute.xlu0 %1016
    %v1018 = vsel %vm426, %v1013, %v1015
    %v1019 = vsel %vm426, %v1015, %v1017
    %v1023 = vadd.f32 %v979, %v1013
    %v1024 = vadd.f32 %v980, %v1018
    %v1025 = vadd.f32 %v981, %v1019
    %1029 = vrot.lane.b32.xlu0 %v1003, 16
    %v1030 = vpop.permute.xlu0 %1029
    %1031 = vrot.lane.b32.xlu0 %v1004, 16
    %v1032 = vpop.permute.xlu0 %1031
    %1033 = vrot.lane.b32.xlu0 %v1005, 16
    %v1034 = vpop.permute.xlu0 %1033
    %vm1035 = vcmask 130048
    %v1036 = vsel %vm1035, %v1030, %v1032
    %v1037 = vsel %vm1035, %v1032, %v1034
    %v1040 = vadd.f32 %v631, %v1036
    %v1041 = vadd.f32 %v632, %v1037
    %1045 = vrot.lane.b32.xlu0 %v1023, 16
    %v1046 = vpop.permute.xlu0 %1045
    %1047 = vrot.lane.b32.xlu0 %v1024, 16
    %v1048 = vpop.permute.xlu0 %1047
    %1049 = vrot.lane.b32.xlu0 %v1025, 16
    %v1050 = vpop.permute.xlu0 %1049
    %v1051 = vsel %vm1035, %v1046, %v1048
    %v1052 = vsel %vm1035, %v1048, %v1050
    %v1055 = vadd.f32 %v648, %v1051
    %v1056 = vadd.f32 %v649, %v1052
    %1057 = vset.pattern.permute.xlu0 8
    %1058 = vperm.xlu0 %1057, %v42
    %v1059 = vpop.permute.xlu0 %1058
    %v1061 = vmul.f32 %v1059, %v76
    %v1062 = vmul.f32 %v1059, %v80
    %v1063 = vmul.f32 %v1059, %v84
    %v1064 = vadd.f32 %v1061, 0.0
    %v1065 = vadd.f32 %v1062, 0.0
    %v1066 = vadd.f32 %v1063, 0.0
    %v1067 = vmul.f32 %v1059, %v94
    %v1068 = vmul.f32 %v1059, %v98
    %v1069 = vmul.f32 %v1059, %v102
    %v1070 = vadd.f32 %v1067, 0.0
    %v1071 = vadd.f32 %v1068, 0.0
    %v1072 = vadd.f32 %v1069, 0.0
    %1073 = vset.pattern.permute.xlu0 9
    %1074 = vperm.xlu0 %1073, %v42
    %v1075 = vpop.permute.xlu0 %1074
    %v1077 = vmul.f32 %v1075, %v116
    %v1078 = vmul.f32 %v1075, %v120
    %v1079 = vmul.f32 %v1075, %v124
    %v1080 = vadd.f32 %v1064, %v1077
    %v1081 = vadd.f32 %v1065, %v1078
    %v1082 = vadd.f32 %v1066, %v1079
    %v1083 = vmul.f32 %v1075, %v134
    %v1084 = vmul.f32 %v1075, %v138
    %v1085 = vmul.f32 %v1075, %v142
    %v1086 = vadd.f32 %v1070, %v1083
    %v1087 = vadd.f32 %v1071, %v1084
    %v1088 = vadd.f32 %v1072, %v1085
    %1089 = vset.pattern.permute.xlu0 10
    %1090 = vperm.xlu0 %1089, %v42
    %v1091 = vpop.permute.xlu0 %1090
    %v1093 = vmul.f32 %v1091, %v156
    %v1094 = vmul.f32 %v1091, %v160
    %v1095 = vmul.f32 %v1091, %v164
    %v1096 = vadd.f32 %v1080, %v1093
    %v1097 = vadd.f32 %v1081, %v1094
    %v1098 = vadd.f32 %v1082, %v1095
    %v1099 = vmul.f32 %v1091, %v174
    %v1100 = vmul.f32 %v1091, %v178
    %v1101 = vmul.f32 %v1091, %v182
    %v1102 = vadd.f32 %v1086, %v1099
    %v1103 = vadd.f32 %v1087, %v1100
    %v1104 = vadd.f32 %v1088, %v1101
    %1105 = vset.pattern.permute.xlu0 11
    %1106 = vperm.xlu0 %1105, %v42
    %v1107 = vpop.permute.xlu0 %1106
    %v1109 = vmul.f32 %v1107, %v196
    %v1110 = vmul.f32 %v1107, %v200
    %v1111 = vmul.f32 %v1107, %v204
    %v1112 = vadd.f32 %v1096, %v1109
    %v1113 = vadd.f32 %v1097, %v1110
    %v1114 = vadd.f32 %v1098, %v1111
    %v1115 = vmul.f32 %v1107, %v214
    %v1116 = vmul.f32 %v1107, %v218
    %v1117 = vmul.f32 %v1107, %v222
    %v1118 = vadd.f32 %v1102, %v1115
    %v1119 = vadd.f32 %v1103, %v1116
    %v1120 = vadd.f32 %v1104, %v1117
    %1121 = vset.pattern.permute.xlu0 20
    %1122 = vperm.xlu0 %1121, %v42
    %v1123 = vpop.permute.xlu0 %1122
    %v1125 = vmul.f32 %v1123, %v80
    %v1126 = vmul.f32 %v1123, %v84
    %v1127 = vmul.f32 %v1123, %v413
    %1131 = vrot.lane.b32.xlu0 %v1125, 112
    %v1132 = vpop.permute.xlu0 %1131
    %1133 = vrot.lane.b32.xlu0 %v1126, 112
    %v1134 = vpop.permute.xlu0 %1133
    %1135 = vrot.lane.b32.xlu0 %v1127, 112
    %v1136 = vpop.permute.xlu0 %1135
    %v1137 = vsel %vm245, %v1132, %v1134
    %v1138 = vsel %vm245, %v1134, %v1136
    %v1142 = vadd.f32 %v1112, %v1132
    %v1143 = vadd.f32 %v1113, %v1137
    %v1144 = vadd.f32 %v1114, %v1138
    %v1145 = vmul.f32 %v1123, %v98
    %v1146 = vmul.f32 %v1123, %v102
    %v1147 = vmul.f32 %v1123, %v438
    %1151 = vrot.lane.b32.xlu0 %v1145, 112
    %v1152 = vpop.permute.xlu0 %1151
    %1153 = vrot.lane.b32.xlu0 %v1146, 112
    %v1154 = vpop.permute.xlu0 %1153
    %1155 = vrot.lane.b32.xlu0 %v1147, 112
    %v1156 = vpop.permute.xlu0 %1155
    %v1157 = vsel %vm245, %v1152, %v1154
    %v1158 = vsel %vm245, %v1154, %v1156
    %v1162 = vadd.f32 %v1118, %v1152
    %v1163 = vadd.f32 %v1119, %v1157
    %v1164 = vadd.f32 %v1120, %v1158
    %1165 = vset.pattern.permute.xlu0 21
    %1166 = vperm.xlu0 %1165, %v42
    %v1167 = vpop.permute.xlu0 %1166
    %v1169 = vmul.f32 %v1167, %v120
    %v1170 = vmul.f32 %v1167, %v124
    %v1171 = vmul.f32 %v1167, %v466
    %1175 = vrot.lane.b32.xlu0 %v1169, 112
    %v1176 = vpop.permute.xlu0 %1175
    %1177 = vrot.lane.b32.xlu0 %v1170, 112
    %v1178 = vpop.permute.xlu0 %1177
    %1179 = vrot.lane.b32.xlu0 %v1171, 112
    %v1180 = vpop.permute.xlu0 %1179
    %v1181 = vsel %vm245, %v1176, %v1178
    %v1182 = vsel %vm245, %v1178, %v1180
    %v1186 = vadd.f32 %v1142, %v1176
    %v1187 = vadd.f32 %v1143, %v1181
    %v1188 = vadd.f32 %v1144, %v1182
    %v1189 = vmul.f32 %v1167, %v138
    %v1190 = vmul.f32 %v1167, %v142
    %v1191 = vmul.f32 %v1167, %v490
    %1195 = vrot.lane.b32.xlu0 %v1189, 112
    %v1196 = vpop.permute.xlu0 %1195
    %1197 = vrot.lane.b32.xlu0 %v1190, 112
    %v1198 = vpop.permute.xlu0 %1197
    %1199 = vrot.lane.b32.xlu0 %v1191, 112
    %v1200 = vpop.permute.xlu0 %1199
    %v1201 = vsel %vm245, %v1196, %v1198
    %v1202 = vsel %vm245, %v1198, %v1200
    %v1206 = vadd.f32 %v1162, %v1196
    %v1207 = vadd.f32 %v1163, %v1201
    %v1208 = vadd.f32 %v1164, %v1202
    %1209 = vset.pattern.permute.xlu0 22
    %1210 = vperm.xlu0 %1209, %v42
    %v1211 = vpop.permute.xlu0 %1210
    %v1213 = vmul.f32 %v1211, %v160
    %v1214 = vmul.f32 %v1211, %v164
    %v1215 = vmul.f32 %v1211, %v518
    %1219 = vrot.lane.b32.xlu0 %v1213, 112
    %v1220 = vpop.permute.xlu0 %1219
    %1221 = vrot.lane.b32.xlu0 %v1214, 112
    %v1222 = vpop.permute.xlu0 %1221
    %1223 = vrot.lane.b32.xlu0 %v1215, 112
    %v1224 = vpop.permute.xlu0 %1223
    %v1225 = vsel %vm245, %v1220, %v1222
    %v1226 = vsel %vm245, %v1222, %v1224
    %v1230 = vadd.f32 %v1186, %v1220
    %v1231 = vadd.f32 %v1187, %v1225
    %v1232 = vadd.f32 %v1188, %v1226
    %v1233 = vmul.f32 %v1211, %v178
    %v1234 = vmul.f32 %v1211, %v182
    %v1235 = vmul.f32 %v1211, %v542
    %1239 = vrot.lane.b32.xlu0 %v1233, 112
    %v1240 = vpop.permute.xlu0 %1239
    %1241 = vrot.lane.b32.xlu0 %v1234, 112
    %v1242 = vpop.permute.xlu0 %1241
    %1243 = vrot.lane.b32.xlu0 %v1235, 112
    %v1244 = vpop.permute.xlu0 %1243
    %v1245 = vsel %vm245, %v1240, %v1242
    %v1246 = vsel %vm245, %v1242, %v1244
    %v1250 = vadd.f32 %v1206, %v1240
    %v1251 = vadd.f32 %v1207, %v1245
    %v1252 = vadd.f32 %v1208, %v1246
    %1253 = vset.pattern.permute.xlu0 23
    %1254 = vperm.xlu0 %1253, %v42
    %v1255 = vpop.permute.xlu0 %1254
    %v1257 = vmul.f32 %v1255, %v200
    %v1258 = vmul.f32 %v1255, %v204
    %v1259 = vmul.f32 %v1255, %v570
    %1263 = vrot.lane.b32.xlu0 %v1257, 112
    %v1264 = vpop.permute.xlu0 %1263
    %1265 = vrot.lane.b32.xlu0 %v1258, 112
    %v1266 = vpop.permute.xlu0 %1265
    %1267 = vrot.lane.b32.xlu0 %v1259, 112
    %v1268 = vpop.permute.xlu0 %1267
    %v1269 = vsel %vm245, %v1264, %v1266
    %v1270 = vsel %vm245, %v1266, %v1268
    %v1274 = vadd.f32 %v1230, %v1264
    %v1275 = vadd.f32 %v1231, %v1269
    %v1276 = vadd.f32 %v1232, %v1270
    %v1277 = vmul.f32 %v1255, %v218
    %v1278 = vmul.f32 %v1255, %v222
    %v1279 = vmul.f32 %v1255, %v594
    %1283 = vrot.lane.b32.xlu0 %v1277, 112
    %v1284 = vpop.permute.xlu0 %1283
    %1285 = vrot.lane.b32.xlu0 %v1278, 112
    %v1286 = vpop.permute.xlu0 %1285
    %1287 = vrot.lane.b32.xlu0 %v1279, 112
    %v1288 = vpop.permute.xlu0 %1287
    %v1289 = vsel %vm245, %v1284, %v1286
    %v1290 = vsel %vm245, %v1286, %v1288
    %v1294 = vadd.f32 %v1250, %v1284
    %v1295 = vadd.f32 %v1251, %v1289
    %v1296 = vadd.f32 %v1252, %v1290
    %1297 = vset.pattern.permute.xlu0 32
    %1298 = vperm.xlu0 %1297, %v42
    %v1299 = vpop.permute.xlu0 %1298
    %v1301 = vmul.f32 %v1299, %v80
    %v1302 = vmul.f32 %v1299, %v84
    %v1303 = vmul.f32 %v1299, %v413
    %1307 = vrot.lane.b32.xlu0 %v1301, 96
    %v1308 = vpop.permute.xlu0 %1307
    %1309 = vrot.lane.b32.xlu0 %v1302, 96
    %v1310 = vpop.permute.xlu0 %1309
    %1311 = vrot.lane.b32.xlu0 %v1303, 96
    %v1312 = vpop.permute.xlu0 %1311
    %v1313 = vsel %vm426, %v1308, %v1310
    %v1314 = vsel %vm426, %v1310, %v1312
    %v1318 = vadd.f32 %v1274, %v1308
    %v1319 = vadd.f32 %v1275, %v1313
    %v1320 = vadd.f32 %v1276, %v1314
    %v1321 = vmul.f32 %v1299, %v98
    %v1322 = vmul.f32 %v1299, %v102
    %v1323 = vmul.f32 %v1299, %v438
    %1327 = vrot.lane.b32.xlu0 %v1321, 96
    %v1328 = vpop.permute.xlu0 %1327
    %1329 = vrot.lane.b32.xlu0 %v1322, 96
    %v1330 = vpop.permute.xlu0 %1329
    %1331 = vrot.lane.b32.xlu0 %v1323, 96
    %v1332 = vpop.permute.xlu0 %1331
    %v1333 = vsel %vm426, %v1328, %v1330
    %v1334 = vsel %vm426, %v1330, %v1332
    %v1338 = vadd.f32 %v1294, %v1328
    %v1339 = vadd.f32 %v1295, %v1333
    %v1340 = vadd.f32 %v1296, %v1334
    %1341 = vset.pattern.permute.xlu0 33
    %1342 = vperm.xlu0 %1341, %v42
    %v1343 = vpop.permute.xlu0 %1342
    %v1345 = vmul.f32 %v1343, %v120
    %v1346 = vmul.f32 %v1343, %v124
    %v1347 = vmul.f32 %v1343, %v466
    %1351 = vrot.lane.b32.xlu0 %v1345, 96
    %v1352 = vpop.permute.xlu0 %1351
    %1353 = vrot.lane.b32.xlu0 %v1346, 96
    %v1354 = vpop.permute.xlu0 %1353
    %1355 = vrot.lane.b32.xlu0 %v1347, 96
    %v1356 = vpop.permute.xlu0 %1355
    %v1357 = vsel %vm426, %v1352, %v1354
    %v1358 = vsel %vm426, %v1354, %v1356
    %v1362 = vadd.f32 %v1318, %v1352
    %v1363 = vadd.f32 %v1319, %v1357
    %v1364 = vadd.f32 %v1320, %v1358
    %v1365 = vmul.f32 %v1343, %v138
    %v1366 = vmul.f32 %v1343, %v142
    %v1367 = vmul.f32 %v1343, %v490
    %1371 = vrot.lane.b32.xlu0 %v1365, 96
    %v1372 = vpop.permute.xlu0 %1371
    %1373 = vrot.lane.b32.xlu0 %v1366, 96
    %v1374 = vpop.permute.xlu0 %1373
    %1375 = vrot.lane.b32.xlu0 %v1367, 96
    %v1376 = vpop.permute.xlu0 %1375
    %v1377 = vsel %vm426, %v1372, %v1374
    %v1378 = vsel %vm426, %v1374, %v1376
    %v1382 = vadd.f32 %v1338, %v1372
    %v1383 = vadd.f32 %v1339, %v1377
    %v1384 = vadd.f32 %v1340, %v1378
    %1385 = vset.pattern.permute.xlu0 34
    %1386 = vperm.xlu0 %1385, %v42
    %v1387 = vpop.permute.xlu0 %1386
    %v1389 = vmul.f32 %v1387, %v160
    %v1390 = vmul.f32 %v1387, %v164
    %v1391 = vmul.f32 %v1387, %v518
    %1395 = vrot.lane.b32.xlu0 %v1389, 96
    %v1396 = vpop.permute.xlu0 %1395
    %1397 = vrot.lane.b32.xlu0 %v1390, 96
    %v1398 = vpop.permute.xlu0 %1397
    %1399 = vrot.lane.b32.xlu0 %v1391, 96
    %v1400 = vpop.permute.xlu0 %1399
    %v1401 = vsel %vm426, %v1396, %v1398
    %v1402 = vsel %vm426, %v1398, %v1400
    %v1406 = vadd.f32 %v1362, %v1396
    %v1407 = vadd.f32 %v1363, %v1401
    %v1408 = vadd.f32 %v1364, %v1402
    %v1409 = vmul.f32 %v1387, %v178
    %v1410 = vmul.f32 %v1387, %v182
    %v1411 = vmul.f32 %v1387, %v542
    %1415 = vrot.lane.b32.xlu0 %v1409, 96
    %v1416 = vpop.permute.xlu0 %1415
    %1417 = vrot.lane.b32.xlu0 %v1410, 96
    %v1418 = vpop.permute.xlu0 %1417
    %1419 = vrot.lane.b32.xlu0 %v1411, 96
    %v1420 = vpop.permute.xlu0 %1419
    %v1421 = vsel %vm426, %v1416, %v1418
    %v1422 = vsel %vm426, %v1418, %v1420
    %v1426 = vadd.f32 %v1382, %v1416
    %v1427 = vadd.f32 %v1383, %v1421
    %v1428 = vadd.f32 %v1384, %v1422
    %1429 = vset.pattern.permute.xlu0 35
    %1430 = vperm.xlu0 %1429, %v42
    %v1431 = vpop.permute.xlu0 %1430
    %v1433 = vmul.f32 %v1431, %v200
    %v1434 = vmul.f32 %v1431, %v204
    %v1435 = vmul.f32 %v1431, %v570
    %1439 = vrot.lane.b32.xlu0 %v1433, 96
    %v1440 = vpop.permute.xlu0 %1439
    %1441 = vrot.lane.b32.xlu0 %v1434, 96
    %v1442 = vpop.permute.xlu0 %1441
    %1443 = vrot.lane.b32.xlu0 %v1435, 96
    %v1444 = vpop.permute.xlu0 %1443
    %v1445 = vsel %vm426, %v1440, %v1442
    %v1446 = vsel %vm426, %v1442, %v1444
    %v1450 = vadd.f32 %v1406, %v1440
    %v1451 = vadd.f32 %v1407, %v1445
    %v1452 = vadd.f32 %v1408, %v1446
    %v1453 = vmul.f32 %v1431, %v218
    %v1454 = vmul.f32 %v1431, %v222
    %v1455 = vmul.f32 %v1431, %v594
    %1459 = vrot.lane.b32.xlu0 %v1453, 96
    %v1460 = vpop.permute.xlu0 %1459
    %1461 = vrot.lane.b32.xlu0 %v1454, 96
    %v1462 = vpop.permute.xlu0 %1461
    %1463 = vrot.lane.b32.xlu0 %v1455, 96
    %v1464 = vpop.permute.xlu0 %1463
    %v1465 = vsel %vm426, %v1460, %v1462
    %v1466 = vsel %vm426, %v1462, %v1464
    %v1470 = vadd.f32 %v1426, %v1460
    %v1471 = vadd.f32 %v1427, %v1465
    %v1472 = vadd.f32 %v1428, %v1466
    %1476 = vrot.lane.b32.xlu0 %v1450, 15
    %v1477 = vpop.permute.xlu0 %1476
    %1478 = vrot.lane.b32.xlu0 %v1451, 15
    %v1479 = vpop.permute.xlu0 %1478
    %1480 = vrot.lane.b32.xlu0 %v1452, 15
    %v1481 = vpop.permute.xlu0 %1480
    %vm1482 = vcmask 121856
    %v1483 = vsel %vm1482, %v1477, %v1479
    %v1484 = vsel %vm1482, %v1479, %v1481
    %v1487 = vmul.f32 %v58, %v1483
    %v1488 = vmul.f32 %v59, %v1484
    %v1489 = vadd.f32 %v1040, %v1487
    %v1490 = vadd.f32 %v1041, %v1488
    %1494 = vrot.lane.b32.xlu0 %v1470, 15
    %v1495 = vpop.permute.xlu0 %1494
    %1496 = vrot.lane.b32.xlu0 %v1471, 15
    %v1497 = vpop.permute.xlu0 %1496
    %1498 = vrot.lane.b32.xlu0 %v1472, 15
    %v1499 = vpop.permute.xlu0 %1498
    %v1500 = vsel %vm1482, %v1495, %v1497
    %v1501 = vsel %vm1482, %v1497, %v1499
    %v1504 = vmul.f32 %v58, %v1500
    %v1505 = vmul.f32 %v59, %v1501
    %v1506 = vadd.f32 %v1055, %v1504
    %v1507 = vadd.f32 %v1056, %v1505
    %1508 = vset.pattern.permute.xlu0 36
    %1509 = vperm.xlu0 %1508, %v42
    %v1510 = vpop.permute.xlu0 %1509
    %v1512 = vadd.f32 %v1489, %v1510
    %v1513 = vadd.f32 %v1490, %v1510
    %vm1514 = vcmp.gt.f32.partialorder %v1512, 0.0
    %vm1515 = vcmp.gt.f32.partialorder %v1513, 0.0
    %v1516 = vmul.f32 %v1512, 0.01
    %v1517 = vmul.f32 %v1513, 0.01
    %v1518 = vsel %vm1514, %v1512, %v1516
    %v1519 = vsel %vm1515, %v1513, %v1517
    %v1520 = vadd.f32 %v36, %v1518
    %v1521 = vadd.f32 %v37, %v1519
    %1522 = vst [vmem:[#allocation8] sm:$0xf] %v1520
    %1523 = vst [vmem:[#allocation8 + $0x8] sm:$0xf] %v1521
    %v1524 = vadd.f32 %v1506, %v1510
    %v1525 = vadd.f32 %v1507, %v1510
    %vm1526 = vcmp.gt.f32.partialorder %v1524, 0.0
    %vm1527 = vcmp.gt.f32.partialorder %v1525, 0.0
    %v1528 = vmul.f32 %v1524, 0.01
    %v1529 = vmul.f32 %v1525, 0.01
    %v1530 = vsel %vm1526, %v1524, %v1528
    %v1531 = vsel %vm1527, %v1525, %v1529
    %v1534 = vrot.slane %v1530, 4
    %v1535 = vrot.slane %v1531, 4
    %v1538 = vadd.f32 %v36, %v1534
    %v1539 = vadd.f32 %v37, %v1535
    %1540 = vst [vmem:[#allocation8] sm:$0xf0] %v1538
    %1541 = vst [vmem:[#allocation8 + $0x8] sm:$0xf0] %v1539
    // Predicated region
    $region18: #{tpu_custom_call.1} parent=1 // pred_check
      _
    $region19: #{tpu_custom_call.1} parent=1 // pred_check_branch
      %1543 = sbr.rel (0) target = $region21
    $region20: #{tpu_custom_call.1} parent=1 // pred_region
      %s1545 = ssub.s32 256, 256
      %1546 = vsyncadd [#allocation5], %s1545
      %s1548 = sshll.u32 [#allocation8], 4
      %s1549 = int_to_ptr.vmem [resolvable:$true] %s1548
      %1551 = dma.vmem_to_hbm [thread:$0]  %s1549, 256, %s2, [#allocation5]
    $region21: #{tpu_custom_call.1} parent=1 // pred_fallthru
      _
    // Predicated region
    $region22: #{tpu_custom_call.1} parent=1 // pred_check
      _
    $region23: #{tpu_custom_call.1} parent=1 // pred_check_branch
      %1553 = sbr.rel (0) target = $region25
    $region24: #{tpu_custom_call.1} parent=1 // pred_region
      %1554 = dma.done [#allocation5], 256
    $region25: #{tpu_custom_call.1} parent=1 // pred_fallthru
      _
    %1555 = vsyncpa [#allocation4], 1
    %1556 = vsyncpa [#allocation7], 1
    %1557 = vsyncpa [#allocation5], 1

</llo_original>
